<compile_context>
chip_gen: v7x
topology: tpu7x:2x2x1
jax: 0.10.0
libtpu: 0.0.40
codegen_flags: <defaults>
</compile_context>

<pallas_src>
import math

import jax
import jax.numpy as jnp
import numpy as np
from jax.experimental import pallas as pl
from jax.experimental.pallas import tpu as pltpu

LN_EPS = 1e-5
_SMALL_ROWS = 10  # bq, bk, bv, bo, b1, b2, ln1_g, ln1_b, ln2_g, ln2_b


def _vmem_limit_bytes():
    # ~75% of physical VMEM per generation (v5e/v6e: 128 MiB -> 96 MiB, v7x: 64 MiB -> 48 MiB).
    try:
        cap = int(pltpu.get_tpu_info().vmem_capacity_bytes)
        if cap > 0:
            return int(0.75 * cap)
    except Exception:
        pass
    return 48 * 1024 * 1024


# --------------------------------------------------------------------------------------
# Fused kernel: grid axis = layer index ("arbitrary"), activation carried in VMEM scratch.
# --------------------------------------------------------------------------------------
def _make_fused_kernel(num_heads, head_dim, embed_dim, ff_dim, self_attention, matmul_dtype):
    H, hd, E, F = num_heads, head_dim, embed_dim, ff_dim
    scale = 1.0 / math.sqrt(hd)
    md = matmul_dtype

    def layer_norm(x, g, b):
        mu = jnp.mean(x, axis=-1, keepdims=True)
        xc = x - mu
        var = jnp.mean(xc * xc, axis=-1, keepdims=True)
        return xc * jax.lax.rsqrt(var + LN_EPS) * g + b

    def layer_body(q_in, k_in, v_in, w_ref, w1_ref, w2_ref, sp_ref):
        # Packed small per-layer params (single DMA); static row/lane slices.
        bq = sp_ref[0:1, :E]
        bk = sp_ref[1:2, :E]
        bv = sp_ref[2:3, :E]
        bo = sp_ref[3:4, :E]
        b1 = sp_ref[4:5, :F]
        b2 = sp_ref[5:6, :E]
        g1 = sp_ref[6:7, :E]
        be1 = sp_ref[7:8, :E]
        g2 = sp_ref[8:9, :E]
        be2 = sp_ref[9:10, :E]

        # Lane-dense in-projections: (L,E)@(E,E), bf16 operands, f32 accumulation.
        # 1/sqrt(head_dim) is folded into Q (bias included, matching PyTorch's q*scaling).
        Q = (jnp.dot(q_in.astype(md), w_ref[0], preferred_element_type=jnp.float32) + bq) * scale
        K = jnp.dot(k_in.astype(md), w_ref[1], preferred_element_type=jnp.float32) + bk
        V = jnp.dot(v_in.astype(md), w_ref[2], preferred_element_type=jnp.float32) + bv
        Qb, Kb, Vb = Q.astype(md), K.astype(md), V.astype(md)

        # Per-head attention (static head loop, 2-D MXU dots, softmax stats in f32).
        # Softmax normalization applied AFTER the PV matmul: scales (Lq,hd), not (Lq,Lk).
        ctx_heads = []
        for h in range(H):
            sl = slice(h * hd, (h + 1) * hd)
            qh, kh, vh = Qb[:, sl], Kb[:, sl], Vb[:, sl]
            s = jax.lax.dot_general(qh, kh, (((1,), (1,)), ((), ())),
                                    preferred_element_type=jnp.float32)      # (Lq, Lk)
            s = s - jnp.max(s, axis=-1, keepdims=True)
            p = jnp.exp(s)
            denom = jnp.sum(p, axis=-1, keepdims=True)
            c = jnp.dot(p.astype(md), vh, preferred_element_type=jnp.float32)  # (Lq, hd)
            ctx_heads.append(c * pl.reciprocal(denom, approx=True))
        ctx = jnp.concatenate(ctx_heads, axis=-1)                            # (Lq, E)

        # Out-projection: single (L,E)@(E,E) matmul (head reduction on the MXU, K=E).
        attn = jnp.dot(ctx.astype(md), w_ref[3], preferred_element_type=jnp.float32) + bo

        # Post-norm residuals + FFN (residual/LN path stays f32).
        x1 = layer_norm(attn + q_in, g1, be1)
        h1 = jnp.maximum(
            jnp.dot(x1.astype(md), w1_ref[...], preferred_element_type=jnp.float32) + b1, 0.0)
        y = jnp.dot(h1.astype(md), w2_ref[...], preferred_element_type=jnp.float32) + b2
        return layer_norm(x1 + y, g2, be2)

    if self_attention:
        # MHABlock self-attention path: layer(v, v, v); q/k inputs are not DMA'd at all.
        def kernel(v_ref, w_ref, w1_ref, w2_ref, sp_ref, out_ref, x_ref):
            layer = pl.program_id(0)

            @pl.when(layer == 0)
            def _():
                x_ref[...] = v_ref[...]

            x = x_ref[...]
            out = layer_body(x, x, x, w_ref, w1_ref, w2_ref, sp_ref)
            x_ref[...] = out

            @pl.when(layer == pl.num_programs(0) - 1)
            def _():
                out_ref[...] = out
    else:
        # Cross-attention path: layer(q, k, v) with v carried across layers.
        def kernel(q_ref, k_ref, v_ref, w_ref, w1_ref, w2_ref, sp_ref, out_ref, x_ref):
            layer = pl.program_id(0)

            @pl.when(layer == 0)
            def _():
                x_ref[...] = v_ref[...]

            x = x_ref[...]
            out = layer_body(q_ref[...], k_ref[...], x, w_ref, w1_ref, w2_ref, sp_ref)
            x_ref[...] = out

            @pl.when(layer == pl.num_programs(0) - 1)
            def _():
                out_ref[...] = out

    return kernel


# --------------------------------------------------------------------------------------
# Wrapper: stack per-layer params (big weights + one packed small-param block), one pallas_call.
# --------------------------------------------------------------------------------------
def _pack_layer_params(layer_params, matmul_dtype):
    E = layer_params[0]["wq"].shape[0]
    F = layer_params[0]["w1"].shape[1]
    W = max(E, F)

    def row(x):
        x = jnp.asarray(x, jnp.float32).reshape(-1)
        return jnp.pad(x, (0, W - x.shape[0]))

    wqkvo = jnp.stack(
        [jnp.stack([p["wq"], p["wk"], p["wv"], p["wo"]], axis=0) for p in layer_params],
        axis=0).astype(matmul_dtype)                                         # (L, 4, E, E)
    w1 = jnp.stack([p["w1"] for p in layer_params], axis=0).astype(matmul_dtype)  # (L, E, F)
    w2 = jnp.stack([p["w2"] for p in layer_params], axis=0).astype(matmul_dtype)  # (L, F, E)
    small = jnp.stack(
        [jnp.stack([row(p["bq"]), row(p["bk"]), row(p["bv"]), row(p["bo"]),
                    row(p["b1"]), row(p["b2"]),
                    row(p["ln1_g"]), row(p["ln1_b"]),
                    row(p["ln2_g"]), row(p["ln2_b"])], axis=0)
         for p in layer_params], axis=0)                                     # (L, 10, W) f32
    return dict(wqkvo=wqkvo, w1=w1, w2=w2, small=small), W


def mha_block_pallas(q, k, v, layer_params, config, matmul_dtype=jnp.bfloat16):
    num_layers = len(layer_params)
    H = config["num_heads"]
    self_attention = bool(config["self_attention"])
    Lv, E = v.shape
    F = layer_params[0]["w1"].shape[1]
    hd = E // H

    packed, W = _pack_layer_params(layer_params, matmul_dtype)
    kernel = _make_fused_kernel(H, hd, E, F, self_attention, matmul_dtype)

    def fixed(shape):
        nd = len(shape)
        return pl.BlockSpec(tuple(shape), lambda l, nd=nd: (0,) * nd)

    def per_layer(shape):
        nd = len(shape)
        return pl.BlockSpec((None,) + tuple(shape), lambda l, nd=nd: (l,) + (0,) * nd)

    weight_specs = [per_layer((4, E, E)), per_layer((E, F)), per_layer((F, E)),
                    per_layer((_SMALL_ROWS, W))]
    weight_args = (packed["wqkvo"], packed["w1"], packed["w2"], packed["small"])

    if self_attention:
        Lq = Lv
        in_specs = [fixed((Lv, E))] + weight_specs
        args = (v,) + weight_args
    else:
        Lq, Lk = q.shape[0], k.shape[0]
        # The carried activation replaces v from layer 1 on; the PyTorch module itself requires
        # equal lengths for that to be well-defined with num_layers > 1.
        assert Lq == Lk == Lv, "cross-attention fused block requires equal q/k/v lengths"
        in_specs = [fixed((Lq, E)), fixed((Lk, E)), fixed((Lv, E))] + weight_specs
        args = (q, k, v) + weight_args

    grid_spec = pltpu.PrefetchScalarGridSpec(
        num_scalar_prefetch=0,
        grid=(num_layers,),
        in_specs=in_specs,
        out_specs=pl.BlockSpec((Lq, E), lambda l: (0, 0)),
        scratch_shapes=[pltpu.VMEM((Lq, E), jnp.float32)],   # activation carry across layers
    )

    return pl.pallas_call(
        kernel,
        out_shape=jax.ShapeDtypeStruct((Lq, E), jnp.float32),
        grid_spec=grid_spec,
        compiler_params=pltpu.CompilerParams(
            dimension_semantics=("arbitrary",),               # layers are sequential (carry)
            vmem_limit_bytes=_vmem_limit_bytes(),
        ),
    )(*args)


# ------------------------------- pure-JAX f32 reference --------------------------------
def mha_layer_ref(q, k, v, p, num_heads):
    E = q.shape[-1]
    hd = E // num_heads
    Q = q @ p["wq"] + p["bq"]
    K = k @ p["wk"] + p["bk"]
    V = v @ p["wv"] + p["bv"]
    outs = []
    for h in range(num_heads):
        sl = slice(h * hd, (h + 1) * hd)
        s = (Q[:, sl] @ K[:, sl].T) / math.sqrt(hd)
        pmat = jax.nn.softmax(s, axis=-1)
        outs.append(pmat @ V[:, sl])
    attn = jnp.concatenate(outs, axis=-1) @ p["wo"] + p["bo"]
    x = attn + q
    x = (x - x.mean(-1, keepdims=True)) * jax.lax.rsqrt(
        x.var(-1, keepdims=True) + LN_EPS) * p["ln1_g"] + p["ln1_b"]
    y = jnp.maximum(x @ p["w1"] + p["b1"], 0.0) @ p["w2"] + p["b2"]
    z = x + y
    return (z - z.mean(-1, keepdims=True)) * jax.lax.rsqrt(
        z.var(-1, keepdims=True) + LN_EPS) * p["ln2_g"] + p["ln2_b"]


def mha_block_ref(q, k, v, layer_params, config):
    for p in layer_params:
        if config["self_attention"]:
            v = mha_layer_ref(v, v, v, p, config["num_heads"])
        else:
            v = mha_layer_ref(q, k, v, p, config["num_heads"])
    return v


# ---------------------------- deterministic parameter init -----------------------------
def init_layer_params(key, embed_dim, ff_dim):
    ks = jax.random.split(key, 8)
    u = lambda k, shape, scale: jax.random.uniform(k, shape, jnp.float32, -scale, scale)
    s_e = 1.0 / math.sqrt(embed_dim)
    s_f = 1.0 / math.sqrt(ff_dim)
    return {
        # weights stored transposed (for x @ W), matching PyTorch x @ W.T + b
        "wq": u(ks[0], (embed_dim, embed_dim), s_e),
        "wk": u(ks[1], (embed_dim, embed_dim), s_e),
        "wv": u(ks[2], (embed_dim, embed_dim), s_e),
        "bq": u(ks[3], (1, embed_dim), s_e),
        "bk": u(ks[4], (1, embed_dim), s_e),
        "bv": u(ks[5], (1, embed_dim), s_e),
        "wo": u(ks[6], (embed_dim, embed_dim), s_e),
        "bo": jnp.zeros((1, embed_dim), jnp.float32),
        "ln1_g": jnp.ones((1, embed_dim), jnp.float32),
        "ln1_b": jnp.zeros((1, embed_dim), jnp.float32),
        "w1": u(ks[7], (embed_dim, ff_dim), s_e),
        "b1": jnp.zeros((1, ff_dim), jnp.float32),
        "w2": u(jax.random.fold_in(key, 99), (ff_dim, embed_dim), s_f),
        "b2": jnp.zeros((1, embed_dim), jnp.float32),
        "ln2_g": jnp.ones((1, embed_dim), jnp.float32),
        "ln2_b": jnp.zeros((1, embed_dim), jnp.float32),
    }


if __name__ == "__main__":
    config = {
        "embed_dim": 32,
        "num_heads": 4,
        "num_layers": 2,
        "ff_dim": 64,
        "bias": True,
        "self_attention": True,   # MHABlock runs layer(v, v, v)
        # non_linearity == ReLU
    }

    key = jax.random.PRNGKey(0)
    kq, kk, kv, kp = jax.random.split(key, 4)
    seq = 8
    q = jax.random.normal(kq, (seq, config["embed_dim"]), jnp.float32)
    k = jax.random.normal(kk, (seq, config["embed_dim"]), jnp.float32)
    v = jax.random.normal(kv, (seq, config["embed_dim"]), jnp.float32)

    layer_params = [
        init_layer_params(jax.random.fold_in(kp, i), config["embed_dim"], config["ff_dim"])
        for i in range(config["num_layers"])
    ]

    out = mha_block_pallas(q, k, v, layer_params, config)
    out = jax.block_until_ready(out)

    ref = jax.block_until_ready(mha_block_ref(q, k, v, layer_params, config))
    # bf16 matmul operands (f32 accumulation) + approximate reciprocal => relaxed tolerance.
    np.testing.assert_allclose(np.asarray(out), np.asarray(ref), rtol=5e-2, atol=6e-2)

    print("KERNEL_OK")
</pallas_src>

<mosaic_0001>
module attributes {stable_mosaic.version = 11 : i64} {
  func.func @kernel(%arg0: i32, %arg1: memref<8x32xf32, #tpu.memory_space<vmem>>, %arg2: memref<1x4x32x32xbf16, #tpu.memory_space<vmem>>, %arg3: memref<1x32x64xbf16, #tpu.memory_space<vmem>>, %arg4: memref<1x64x32xbf16, #tpu.memory_space<vmem>>, %arg5: memref<1x10x64xf32, #tpu.memory_space<vmem>>, %arg6: memref<8x32xf32, #tpu.memory_space<vmem>>, %arg7: memref<8x32xf32, #tpu.memory_space<vmem>>) attributes {dimension_semantics = [#tpu.dimension_semantics<arbitrary>], iteration_bounds = array<i64: 2>, scalar_prefetch = 0 : i64, scratch_operands = 1 : i64, tpu.core_type = #tpu.core_type<tc>, window_params = [{pipeline_mode = #tpu.pipeline_mode<synchronous>, transform_indices = @transform_0, window_bounds = array<i64: 8, 32>}, {transform_indices = @transform_1, window_bounds = array<i64: 1, 4, 32, 32>}, {transform_indices = @transform_2, window_bounds = array<i64: 1, 32, 64>}, {transform_indices = @transform_3, window_bounds = array<i64: 1, 64, 32>}, {transform_indices = @transform_4, window_bounds = array<i64: 1, 10, 64>}, {pipeline_mode = #tpu.pipeline_mode<synchronous>, transform_indices = @transform_5, window_bounds = array<i64: 8, 32>}]} {
    %c0_i32 = arith.constant 0 : i32
    %0 = arith.cmpi eq, %arg0, %c0_i32 : i32
    %1 = arith.extui %0 : i1 to i32
    %c0_i32_0 = arith.constant 0 : i32
    %2 = arith.cmpi ne, %1, %c0_i32_0 : i32
    scf.if %2 {
      %c0_81 = arith.constant 0 : index
      %c0_82 = arith.constant 0 : index
      %178 = vector.load %arg1[%c0_81, %c0_82] : memref<8x32xf32, #tpu.memory_space<vmem>>, vector<8x32xf32>
      %c0_83 = arith.constant 0 : index
      %c0_84 = arith.constant 0 : index
      %179 = vector.load %arg7[%c0_83, %c0_84] : memref<8x32xf32, #tpu.memory_space<vmem>>, vector<8x32xf32>
      tpu.vector_store %arg7[%c0_83, %c0_84], %178 {strides = array<i32>} : memref<8x32xf32, #tpu.memory_space<vmem>>, vector<8x32xf32>,
    } else {
    }
    %c0 = arith.constant 0 : index
    %c0_1 = arith.constant 0 : index
    %3 = vector.load %arg7[%c0, %c0_1] : memref<8x32xf32, #tpu.memory_space<vmem>>, vector<8x32xf32>
    %c0_2 = arith.constant 0 : index
    %c0_3 = arith.constant 0 : index
    %c0_4 = arith.constant 0 : index
    %4 = vector.load %arg5[%c0_2, %c0_3, %c0_4] : memref<1x10x64xf32, #tpu.memory_space<vmem>>, vector<1x1x32xf32>
    %5 = vector.shape_cast %4 : vector<1x1x32xf32> to vector<1x32xf32>
    %c0_5 = arith.constant 0 : index
    %c1 = arith.constant 1 : index
    %c0_6 = arith.constant 0 : index
    %6 = vector.load %arg5[%c0_5, %c1, %c0_6] : memref<1x10x64xf32, #tpu.memory_space<vmem>>, vector<1x1x32xf32>
    %7 = vector.shape_cast %6 : vector<1x1x32xf32> to vector<1x32xf32>
    %c0_7 = arith.constant 0 : index
    %c2 = arith.constant 2 : index
    %c0_8 = arith.constant 0 : index
    %8 = vector.load %arg5[%c0_7, %c2, %c0_8] : memref<1x10x64xf32, #tpu.memory_space<vmem>>, vector<1x1x32xf32>
    %9 = vector.shape_cast %8 : vector<1x1x32xf32> to vector<1x32xf32>
    %c0_9 = arith.constant 0 : index
    %c3 = arith.constant 3 : index
    %c0_10 = arith.constant 0 : index
    %10 = vector.load %arg5[%c0_9, %c3, %c0_10] : memref<1x10x64xf32, #tpu.memory_space<vmem>>, vector<1x1x32xf32>
    %11 = vector.shape_cast %10 : vector<1x1x32xf32> to vector<1x32xf32>
    %c0_11 = arith.constant 0 : index
    %c4 = arith.constant 4 : index
    %c0_12 = arith.constant 0 : index
    %12 = vector.load %arg5[%c0_11, %c4, %c0_12] : memref<1x10x64xf32, #tpu.memory_space<vmem>>, vector<1x1x64xf32>
    %13 = vector.shape_cast %12 : vector<1x1x64xf32> to vector<1x64xf32>
    %c0_13 = arith.constant 0 : index
    %c5 = arith.constant 5 : index
    %c0_14 = arith.constant 0 : index
    %14 = vector.load %arg5[%c0_13, %c5, %c0_14] : memref<1x10x64xf32, #tpu.memory_space<vmem>>, vector<1x1x32xf32>
    %15 = vector.shape_cast %14 : vector<1x1x32xf32> to vector<1x32xf32>
    %c0_15 = arith.constant 0 : index
    %c6 = arith.constant 6 : index
    %c0_16 = arith.constant 0 : index
    %16 = vector.load %arg5[%c0_15, %c6, %c0_16] : memref<1x10x64xf32, #tpu.memory_space<vmem>>, vector<1x1x32xf32>
    %17 = vector.shape_cast %16 : vector<1x1x32xf32> to vector<1x32xf32>
    %c0_17 = arith.constant 0 : index
    %c7 = arith.constant 7 : index
    %c0_18 = arith.constant 0 : index
    %18 = vector.load %arg5[%c0_17, %c7, %c0_18] : memref<1x10x64xf32, #tpu.memory_space<vmem>>, vector<1x1x32xf32>
    %19 = vector.shape_cast %18 : vector<1x1x32xf32> to vector<1x32xf32>
    %c0_19 = arith.constant 0 : index
    %c8 = arith.constant 8 : index
    %c0_20 = arith.constant 0 : index
    %20 = vector.load %arg5[%c0_19, %c8, %c0_20] : memref<1x10x64xf32, #tpu.memory_space<vmem>>, vector<1x1x32xf32>
    %21 = vector.shape_cast %20 : vector<1x1x32xf32> to vector<1x32xf32>
    %c0_21 = arith.constant 0 : index
    %c9 = arith.constant 9 : index
    %c0_22 = arith.constant 0 : index
    %22 = vector.load %arg5[%c0_21, %c9, %c0_22] : memref<1x10x64xf32, #tpu.memory_space<vmem>>, vector<1x1x32xf32>
    %23 = vector.shape_cast %22 : vector<1x1x32xf32> to vector<1x32xf32>
    %24 = arith.truncf %3 : vector<8x32xf32> to vector<8x32xbf16>
    %c0_23 = arith.constant 0 : index
    %c0_24 = arith.constant 0 : index
    %c0_25 = arith.constant 0 : index
    %c0_26 = arith.constant 0 : index
    %25 = vector.load %arg2[%c0_23, %c0_24, %c0_25, %c0_26] : memref<1x4x32x32xbf16, #tpu.memory_space<vmem>>, vector<1x1x32x32xbf16>
    %26 = vector.shape_cast %25 : vector<1x1x32x32xbf16> to vector<32x32xbf16>
    %cst = arith.constant dense<0.000000e+00> : vector<8x32xf32>
    %27 = tpu.matmul %24, %26, %cst {dimension_numbers = #tpu.dot_dimension_numbers<[1], [0], [0], [1], [0, 0, 1, 1], [], []>} : vector<8x32xbf16>, vector<32x32xbf16>, vector<8x32xf32> -> vector<8x32xf32>
    %28 = vector.broadcast %5 : vector<1x32xf32> to vector<8x32xf32>
    %29 = arith.addf %27, %28 : vector<8x32xf32>
    %cst_27 = arith.constant 0.353553385 : f32
    %30 = vector.broadcast %cst_27 : f32 to vector<8x32xf32>
    %31 = arith.mulf %29, %30 : vector<8x32xf32>
    %32 = arith.truncf %3 : vector<8x32xf32> to vector<8x32xbf16>
    %c0_28 = arith.constant 0 : index
    %c1_29 = arith.constant 1 : index
    %c0_30 = arith.constant 0 : index
    %c0_31 = arith.constant 0 : index
    %33 = vector.load %arg2[%c0_28, %c1_29, %c0_30, %c0_31] : memref<1x4x32x32xbf16, #tpu.memory_space<vmem>>, vector<1x1x32x32xbf16>
    %34 = vector.shape_cast %33 : vector<1x1x32x32xbf16> to vector<32x32xbf16>
    %cst_32 = arith.constant dense<0.000000e+00> : vector<8x32xf32>
    %35 = tpu.matmul %32, %34, %cst_32 {dimension_numbers = #tpu.dot_dimension_numbers<[1], [0], [0], [1], [0, 0, 1, 1], [], []>} : vector<8x32xbf16>, vector<32x32xbf16>, vector<8x32xf32> -> vector<8x32xf32>
    %36 = vector.broadcast %7 : vector<1x32xf32> to vector<8x32xf32>
    %37 = arith.addf %35, %36 : vector<8x32xf32>
    %38 = arith.truncf %3 : vector<8x32xf32> to vector<8x32xbf16>
    %c0_33 = arith.constant 0 : index
    %c2_34 = arith.constant 2 : index
    %c0_35 = arith.constant 0 : index
    %c0_36 = arith.constant 0 : index
    %39 = vector.load %arg2[%c0_33, %c2_34, %c0_35, %c0_36] : memref<1x4x32x32xbf16, #tpu.memory_space<vmem>>, vector<1x1x32x32xbf16>
    %40 = vector.shape_cast %39 : vector<1x1x32x32xbf16> to vector<32x32xbf16>
    %cst_37 = arith.constant dense<0.000000e+00> : vector<8x32xf32>
    %41 = tpu.matmul %38, %40, %cst_37 {dimension_numbers = #tpu.dot_dimension_numbers<[1], [0], [0], [1], [0, 0, 1, 1], [], []>} : vector<8x32xbf16>, vector<32x32xbf16>, vector<8x32xf32> -> vector<8x32xf32>
    %42 = vector.broadcast %9 : vector<1x32xf32> to vector<8x32xf32>
    %43 = arith.addf %41, %42 : vector<8x32xf32>
    %44 = arith.truncf %31 : vector<8x32xf32> to vector<8x32xbf16>
    %45 = arith.truncf %37 : vector<8x32xf32> to vector<8x32xbf16>
    %46 = arith.truncf %43 : vector<8x32xf32> to vector<8x32xbf16>
    %47 = vector.extract_strided_slice %44 {offsets = [0, 0], sizes = [8, 8], strides = [1, 1]} : vector<8x32xbf16> to vector<8x8xbf16>
    %48 = vector.extract_strided_slice %45 {offsets = [0, 0], sizes = [8, 8], strides = [1, 1]} : vector<8x32xbf16> to vector<8x8xbf16>
    %49 = vector.extract_strided_slice %46 {offsets = [0, 0], sizes = [8, 8], strides = [1, 1]} : vector<8x32xbf16> to vector<8x8xbf16>
    %cst_38 = arith.constant dense<0.000000e+00> : vector<8x8xf32>
    %50 = tpu.matmul %47, %48, %cst_38 {dimension_numbers = #tpu.dot_dimension_numbers<[1], [1], [0], [0], [0, 0, 1, 0], [], []>} : vector<8x8xbf16>, vector<8x8xbf16>, vector<8x8xf32> -> vector<8x8xf32>
    %cst_39 = arith.constant dense<0xFF800000> : vector<8xf32>
    %51 = vector.multi_reduction <maximumf>, %50, %cst_39 [1] : vector<8x8xf32> to vector<8xf32>
    %52 = vector.shape_cast %51 : vector<8xf32> to vector<8x1xf32>
    %53 = vector.broadcast %52 : vector<8x1xf32> to vector<8x8xf32>
    %54 = arith.subf %50, %53 : vector<8x8xf32>
    %55 = math.exp %54 : vector<8x8xf32>
    %cst_40 = arith.constant dense<0.000000e+00> : vector<8xf32>
    %56 = vector.multi_reduction <add>, %55, %cst_40 [1] : vector<8x8xf32> to vector<8xf32>
    %57 = vector.shape_cast %56 : vector<8xf32> to vector<8x1xf32>
    %58 = arith.truncf %55 : vector<8x8xf32> to vector<8x8xbf16>
    %cst_41 = arith.constant dense<0.000000e+00> : vector<8x8xf32>
    %59 = tpu.matmul %58, %49, %cst_41 {dimension_numbers = #tpu.dot_dimension_numbers<[1], [0], [0], [1], [0, 0, 1, 1], [], []>} : vector<8x8xbf16>, vector<8x8xbf16>, vector<8x8xf32> -> vector<8x8xf32>
    %60 = tpu.reciprocal %57 {approx = true} : vector<8x1xf32> -> vector<8x1xf32>
    %61 = vector.broadcast %60 : vector<8x1xf32> to vector<8x8xf32>
    %62 = arith.mulf %59, %61 : vector<8x8xf32>
    %63 = vector.extract_strided_slice %44 {offsets = [0, 8], sizes = [8, 8], strides = [1, 1]} : vector<8x32xbf16> to vector<8x8xbf16>
    %64 = vector.extract_strided_slice %45 {offsets = [0, 8], sizes = [8, 8], strides = [1, 1]} : vector<8x32xbf16> to vector<8x8xbf16>
    %65 = vector.extract_strided_slice %46 {offsets = [0, 8], sizes = [8, 8], strides = [1, 1]} : vector<8x32xbf16> to vector<8x8xbf16>
    %cst_42 = arith.constant dense<0.000000e+00> : vector<8x8xf32>
    %66 = tpu.matmul %63, %64, %cst_42 {dimension_numbers = #tpu.dot_dimension_numbers<[1], [1], [0], [0], [0, 0, 1, 0], [], []>} : vector<8x8xbf16>, vector<8x8xbf16>, vector<8x8xf32> -> vector<8x8xf32>
    %cst_43 = arith.constant dense<0xFF800000> : vector<8xf32>
    %67 = vector.multi_reduction <maximumf>, %66, %cst_43 [1] : vector<8x8xf32> to vector<8xf32>
    %68 = vector.shape_cast %67 : vector<8xf32> to vector<8x1xf32>
    %69 = vector.broadcast %68 : vector<8x1xf32> to vector<8x8xf32>
    %70 = arith.subf %66, %69 : vector<8x8xf32>
    %71 = math.exp %70 : vector<8x8xf32>
    %cst_44 = arith.constant dense<0.000000e+00> : vector<8xf32>
    %72 = vector.multi_reduction <add>, %71, %cst_44 [1] : vector<8x8xf32> to vector<8xf32>
    %73 = vector.shape_cast %72 : vector<8xf32> to vector<8x1xf32>
    %74 = arith.truncf %71 : vector<8x8xf32> to vector<8x8xbf16>
    %cst_45 = arith.constant dense<0.000000e+00> : vector<8x8xf32>
    %75 = tpu.matmul %74, %65, %cst_45 {dimension_numbers = #tpu.dot_dimension_numbers<[1], [0], [0], [1], [0, 0, 1, 1], [], []>} : vector<8x8xbf16>, vector<8x8xbf16>, vector<8x8xf32> -> vector<8x8xf32>
    %76 = tpu.reciprocal %73 {approx = true} : vector<8x1xf32> -> vector<8x1xf32>
    %77 = vector.broadcast %76 : vector<8x1xf32> to vector<8x8xf32>
    %78 = arith.mulf %75, %77 : vector<8x8xf32>
    %79 = vector.extract_strided_slice %44 {offsets = [0, 16], sizes = [8, 8], strides = [1, 1]} : vector<8x32xbf16> to vector<8x8xbf16>
    %80 = vector.extract_strided_slice %45 {offsets = [0, 16], sizes = [8, 8], strides = [1, 1]} : vector<8x32xbf16> to vector<8x8xbf16>
    %81 = vector.extract_strided_slice %46 {offsets = [0, 16], sizes = [8, 8], strides = [1, 1]} : vector<8x32xbf16> to vector<8x8xbf16>
    %cst_46 = arith.constant dense<0.000000e+00> : vector<8x8xf32>
    %82 = tpu.matmul %79, %80, %cst_46 {dimension_numbers = #tpu.dot_dimension_numbers<[1], [1], [0], [0], [0, 0, 1, 0], [], []>} : vector<8x8xbf16>, vector<8x8xbf16>, vector<8x8xf32> -> vector<8x8xf32>
    %cst_47 = arith.constant dense<0xFF800000> : vector<8xf32>
    %83 = vector.multi_reduction <maximumf>, %82, %cst_47 [1] : vector<8x8xf32> to vector<8xf32>
    %84 = vector.shape_cast %83 : vector<8xf32> to vector<8x1xf32>
    %85 = vector.broadcast %84 : vector<8x1xf32> to vector<8x8xf32>
    %86 = arith.subf %82, %85 : vector<8x8xf32>
    %87 = math.exp %86 : vector<8x8xf32>
    %cst_48 = arith.constant dense<0.000000e+00> : vector<8xf32>
    %88 = vector.multi_reduction <add>, %87, %cst_48 [1] : vector<8x8xf32> to vector<8xf32>
    %89 = vector.shape_cast %88 : vector<8xf32> to vector<8x1xf32>
    %90 = arith.truncf %87 : vector<8x8xf32> to vector<8x8xbf16>
    %cst_49 = arith.constant dense<0.000000e+00> : vector<8x8xf32>
    %91 = tpu.matmul %90, %81, %cst_49 {dimension_numbers = #tpu.dot_dimension_numbers<[1], [0], [0], [1], [0, 0, 1, 1], [], []>} : vector<8x8xbf16>, vector<8x8xbf16>, vector<8x8xf32> -> vector<8x8xf32>
    %92 = tpu.reciprocal %89 {approx = true} : vector<8x1xf32> -> vector<8x1xf32>
    %93 = vector.broadcast %92 : vector<8x1xf32> to vector<8x8xf32>
    %94 = arith.mulf %91, %93 : vector<8x8xf32>
    %95 = vector.extract_strided_slice %44 {offsets = [0, 24], sizes = [8, 8], strides = [1, 1]} : vector<8x32xbf16> to vector<8x8xbf16>
    %96 = vector.extract_strided_slice %45 {offsets = [0, 24], sizes = [8, 8], strides = [1, 1]} : vector<8x32xbf16> to vector<8x8xbf16>
    %97 = vector.extract_strided_slice %46 {offsets = [0, 24], sizes = [8, 8], strides = [1, 1]} : vector<8x32xbf16> to vector<8x8xbf16>
    %cst_50 = arith.constant dense<0.000000e+00> : vector<8x8xf32>
    %98 = tpu.matmul %95, %96, %cst_50 {dimension_numbers = #tpu.dot_dimension_numbers<[1], [1], [0], [0], [0, 0, 1, 0], [], []>} : vector<8x8xbf16>, vector<8x8xbf16>, vector<8x8xf32> -> vector<8x8xf32>
    %cst_51 = arith.constant dense<0xFF800000> : vector<8xf32>
    %99 = vector.multi_reduction <maximumf>, %98, %cst_51 [1] : vector<8x8xf32> to vector<8xf32>
    %100 = vector.shape_cast %99 : vector<8xf32> to vector<8x1xf32>
    %101 = vector.broadcast %100 : vector<8x1xf32> to vector<8x8xf32>
    %102 = arith.subf %98, %101 : vector<8x8xf32>
    %103 = math.exp %102 : vector<8x8xf32>
    %cst_52 = arith.constant dense<0.000000e+00> : vector<8xf32>
    %104 = vector.multi_reduction <add>, %103, %cst_52 [1] : vector<8x8xf32> to vector<8xf32>
    %105 = vector.shape_cast %104 : vector<8xf32> to vector<8x1xf32>
    %106 = arith.truncf %103 : vector<8x8xf32> to vector<8x8xbf16>
    %cst_53 = arith.constant dense<0.000000e+00> : vector<8x8xf32>
    %107 = tpu.matmul %106, %97, %cst_53 {dimension_numbers = #tpu.dot_dimension_numbers<[1], [0], [0], [1], [0, 0, 1, 1], [], []>} : vector<8x8xbf16>, vector<8x8xbf16>, vector<8x8xf32> -> vector<8x8xf32>
    %108 = tpu.reciprocal %105 {approx = true} : vector<8x1xf32> -> vector<8x1xf32>
    %109 = vector.broadcast %108 : vector<8x1xf32> to vector<8x8xf32>
    %110 = arith.mulf %107, %109 : vector<8x8xf32>
    %111 = tpu.concatenate %62, %78, %94, %110 in 1 : vector<8x8xf32>, vector<8x8xf32>, vector<8x8xf32>, vector<8x8xf32> -> vector<8x32xf32>
    %112 = arith.truncf %111 : vector<8x32xf32> to vector<8x32xbf16>
    %c0_54 = arith.constant 0 : index
    %c3_55 = arith.constant 3 : index
    %c0_56 = arith.constant 0 : index
    %c0_57 = arith.constant 0 : index
    %113 = vector.load %arg2[%c0_54, %c3_55, %c0_56, %c0_57] : memref<1x4x32x32xbf16, #tpu.memory_space<vmem>>, vector<1x1x32x32xbf16>
    %114 = vector.shape_cast %113 : vector<1x1x32x32xbf16> to vector<32x32xbf16>
    %cst_58 = arith.constant dense<0.000000e+00> : vector<8x32xf32>
    %115 = tpu.matmul %112, %114, %cst_58 {dimension_numbers = #tpu.dot_dimension_numbers<[1], [0], [0], [1], [0, 0, 1, 1], [], []>} : vector<8x32xbf16>, vector<32x32xbf16>, vector<8x32xf32> -> vector<8x32xf32>
    %116 = vector.broadcast %11 : vector<1x32xf32> to vector<8x32xf32>
    %117 = arith.addf %115, %116 : vector<8x32xf32>
    %118 = arith.addf %117, %3 : vector<8x32xf32>
    %cst_59 = arith.constant dense<0.000000e+00> : vector<8xf32>
    %119 = vector.multi_reduction <add>, %118, %cst_59 [1] : vector<8x32xf32> to vector<8xf32>
    %120 = vector.shape_cast %119 : vector<8xf32> to vector<8x1xf32>
    %cst_60 = arith.constant 3.200000e+01 : f32
    %121 = vector.broadcast %cst_60 : f32 to vector<8x1xf32>
    %122 = arith.divf %120, %121 : vector<8x1xf32>
    %123 = vector.broadcast %122 : vector<8x1xf32> to vector<8x32xf32>
    %124 = arith.subf %118, %123 : vector<8x32xf32>
    %125 = arith.mulf %124, %124 : vector<8x32xf32>
    %cst_61 = arith.constant dense<0.000000e+00> : vector<8xf32>
    %126 = vector.multi_reduction <add>, %125, %cst_61 [1] : vector<8x32xf32> to vector<8xf32>
    %127 = vector.shape_cast %126 : vector<8xf32> to vector<8x1xf32>
    %cst_62 = arith.constant 3.200000e+01 : f32
    %128 = vector.broadcast %cst_62 : f32 to vector<8x1xf32>
    %129 = arith.divf %127, %128 : vector<8x1xf32>
    %cst_63 = arith.constant 9.99999974E-6 : f32
    %130 = vector.broadcast %cst_63 : f32 to vector<8x1xf32>
    %131 = arith.addf %129, %130 : vector<8x1xf32>
    %132 = math.rsqrt %131 : vector<8x1xf32>
    %133 = vector.broadcast %132 : vector<8x1xf32> to vector<8x32xf32>
    %134 = arith.mulf %124, %133 : vector<8x32xf32>
    %135 = vector.broadcast %17 : vector<1x32xf32> to vector<8x32xf32>
    %136 = arith.mulf %134, %135 : vector<8x32xf32>
    %137 = vector.broadcast %19 : vector<1x32xf32> to vector<8x32xf32>
    %138 = arith.addf %136, %137 : vector<8x32xf32>
    %139 = arith.truncf %138 : vector<8x32xf32> to vector<8x32xbf16>
    %c0_64 = arith.constant 0 : index
    %c0_65 = arith.constant 0 : index
    %c0_66 = arith.constant 0 : index
    %140 = vector.load %arg3[%c0_64, %c0_65, %c0_66] : memref<1x32x64xbf16, #tpu.memory_space<vmem>>, vector<1x32x64xbf16>
    %141 = vector.shape_cast %140 : vector<1x32x64xbf16> to vector<32x64xbf16>
    %cst_67 = arith.constant dense<0.000000e+00> : vector<8x64xf32>
    %142 = tpu.matmul %139, %141, %cst_67 {dimension_numbers = #tpu.dot_dimension_numbers<[1], [0], [0], [1], [0, 0, 1, 1], [], []>} : vector<8x32xbf16>, vector<32x64xbf16>, vector<8x64xf32> -> vector<8x64xf32>
    %143 = vector.broadcast %13 : vector<1x64xf32> to vector<8x64xf32>
    %144 = arith.addf %142, %143 : vector<8x64xf32>
    %cst_68 = arith.constant 0.000000e+00 : f32
    %145 = vector.broadcast %cst_68 : f32 to vector<8x64xf32>
    %146 = arith.maximumf %144, %145 : vector<8x64xf32>
    %147 = arith.truncf %146 : vector<8x64xf32> to vector<8x64xbf16>
    %c0_69 = arith.constant 0 : index
    %c0_70 = arith.constant 0 : index
    %c0_71 = arith.constant 0 : index
    %148 = vector.load %arg4[%c0_69, %c0_70, %c0_71] : memref<1x64x32xbf16, #tpu.memory_space<vmem>>, vector<1x64x32xbf16>
    %149 = vector.shape_cast %148 : vector<1x64x32xbf16> to vector<64x32xbf16>
    %cst_72 = arith.constant dense<0.000000e+00> : vector<8x32xf32>
    %150 = tpu.matmul %147, %149, %cst_72 {dimension_numbers = #tpu.dot_dimension_numbers<[1], [0], [0], [1], [0, 0, 1, 1], [], []>} : vector<8x64xbf16>, vector<64x32xbf16>, vector<8x32xf32> -> vector<8x32xf32>
    %151 = vector.broadcast %15 : vector<1x32xf32> to vector<8x32xf32>
    %152 = arith.addf %150, %151 : vector<8x32xf32>
    %153 = arith.addf %138, %152 : vector<8x32xf32>
    %cst_73 = arith.constant dense<0.000000e+00> : vector<8xf32>
    %154 = vector.multi_reduction <add>, %153, %cst_73 [1] : vector<8x32xf32> to vector<8xf32>
    %155 = vector.shape_cast %154 : vector<8xf32> to vector<8x1xf32>
    %cst_74 = arith.constant 3.200000e+01 : f32
    %156 = vector.broadcast %cst_74 : f32 to vector<8x1xf32>
    %157 = arith.divf %155, %156 : vector<8x1xf32>
    %158 = vector.broadcast %157 : vector<8x1xf32> to vector<8x32xf32>
    %159 = arith.subf %153, %158 : vector<8x32xf32>
    %160 = arith.mulf %159, %159 : vector<8x32xf32>
    %cst_75 = arith.constant dense<0.000000e+00> : vector<8xf32>
    %161 = vector.multi_reduction <add>, %160, %cst_75 [1] : vector<8x32xf32> to vector<8xf32>
    %162 = vector.shape_cast %161 : vector<8xf32> to vector<8x1xf32>
    %cst_76 = arith.constant 3.200000e+01 : f32
    %163 = vector.broadcast %cst_76 : f32 to vector<8x1xf32>
    %164 = arith.divf %162, %163 : vector<8x1xf32>
    %cst_77 = arith.constant 9.99999974E-6 : f32
    %165 = vector.broadcast %cst_77 : f32 to vector<8x1xf32>
    %166 = arith.addf %164, %165 : vector<8x1xf32>
    %167 = math.rsqrt %166 : vector<8x1xf32>
    %168 = vector.broadcast %167 : vector<8x1xf32> to vector<8x32xf32>
    %169 = arith.mulf %159, %168 : vector<8x32xf32>
    %170 = vector.broadcast %21 : vector<1x32xf32> to vector<8x32xf32>
    %171 = arith.mulf %169, %170 : vector<8x32xf32>
    %172 = vector.broadcast %23 : vector<1x32xf32> to vector<8x32xf32>
    %173 = arith.addf %171, %172 : vector<8x32xf32>
    %c0_78 = arith.constant 0 : index
    %c0_79 = arith.constant 0 : index
    %174 = vector.load %arg7[%c0_78, %c0_79] : memref<8x32xf32, #tpu.memory_space<vmem>>, vector<8x32xf32>
    tpu.vector_store %arg7[%c0_78, %c0_79], %173 {strides = array<i32>} : memref<8x32xf32, #tpu.memory_space<vmem>>, vector<8x32xf32>,
    %c1_i32 = arith.constant 1 : i32
    %175 = arith.cmpi eq, %arg0, %c1_i32 : i32
    %176 = arith.extui %175 : i1 to i32
    %c0_i32_80 = arith.constant 0 : i32
    %177 = arith.cmpi ne, %176, %c0_i32_80 : i32
    scf.if %177 {
      %c0_81 = arith.constant 0 : index
      %c0_82 = arith.constant 0 : index
      %178 = vector.load %arg6[%c0_81, %c0_82] : memref<8x32xf32, #tpu.memory_space<vmem>>, vector<8x32xf32>
      tpu.vector_store %arg6[%c0_81, %c0_82], %173 {strides = array<i32>} : memref<8x32xf32, #tpu.memory_space<vmem>>, vector<8x32xf32>,
    } else {
    }
    return
  }
  func.func @transform_0(%arg0: i32) -> (i32, i32) {
    %c0_i32 = arith.constant 0 : i32
    %c0_i32_0 = arith.constant 0 : i32
    %c0_i32_1 = arith.constant 0 : i32
    return %c0_i32, %c0_i32_0 : i32, i32
  }
  func.func @transform_1(%arg0: i32) -> (i32, i32, i32, i32) {
    %c0_i32 = arith.constant 0 : i32
    %c0_i32_0 = arith.constant 0 : i32
    %c0_i32_1 = arith.constant 0 : i32
    %c0_i32_2 = arith.constant 0 : i32
    return %arg0, %c0_i32, %c0_i32_0, %c0_i32_1 : i32, i32, i32, i32
  }
  func.func @transform_2(%arg0: i32) -> (i32, i32, i32) {
    %c0_i32 = arith.constant 0 : i32
    %c0_i32_0 = arith.constant 0 : i32
    %c0_i32_1 = arith.constant 0 : i32
    return %arg0, %c0_i32, %c0_i32_0 : i32, i32, i32
  }
  func.func @transform_3(%arg0: i32) -> (i32, i32, i32) {
    %c0_i32 = arith.constant 0 : i32
    %c0_i32_0 = arith.constant 0 : i32
    %c0_i32_1 = arith.constant 0 : i32
    return %arg0, %c0_i32, %c0_i32_0 : i32, i32, i32
  }
  func.func @transform_4(%arg0: i32) -> (i32, i32, i32) {
    %c0_i32 = arith.constant 0 : i32
    %c0_i32_0 = arith.constant 0 : i32
    %c0_i32_1 = arith.constant 0 : i32
    return %arg0, %c0_i32, %c0_i32_0 : i32, i32, i32
  }
  func.func @transform_5(%arg0: i32) -> (i32, i32) {
    %c0_i32 = arith.constant 0 : i32
    %c0_i32_0 = arith.constant 0 : i32
    %c0_i32_1 = arith.constant 0 : i32
    return %c0_i32, %c0_i32_0 : i32, i32
  }
}

</mosaic_0001>

<llo_original>
// kernel: tpu_custom_call.1
$region0: #{tpu_custom_call.1}
  #allocation0 [shape = 'u32[]', space=smem, size = 0x4, offset = 0x4, fixed_abs, tag = 'smem constant byte address 0x4 - core index']
  #allocation1 [shape = 'u32[144,128]{1,0:T(1,128)}', space=vmem, size = 0x12000, scoped, tag = 'internal scratch']
  #allocation2 [shape = 'f32[8,32]{1,0:T(8,128)}', space=vmem, size = 0x1000, scoped, tag = 'scratch operand']
  %s0 = inlined_call_operand.vmem [shape: f32[8,32], index: 0, kind: input, shape index: {}]
  %s1 = inlined_call_operand.vmem [shape: bf16[2,4,32,32], index: 1, kind: input, shape index: {}]
  %s2 = inlined_call_operand.hbm [shape: bf16[2,32,64], index: 2, kind: input, shape index: {}]
  %s3 = inlined_call_operand.vmem [shape: bf16[2,64,32], index: 3, kind: input, shape index: {}]
  %s4 = inlined_call_operand.vmem [shape: f32[2,10,64], index: 4, kind: input, shape index: {}]
  %s5 = inlined_call_operand.hbm [shape: f32[8,32], index: 5, kind: output, shape index: {}]
  %s6 = sld [smem:[#allocation0]]
  $region65: #{tpu_custom_call.1} parent=0
    _
  %s8 = ssub.s32 1, %s6
  %s9 = scalar_select 0, %s8, %s6
  $region1: #{tpu_custom_call.1} parent=0
    #allocation3 [shape = 'u8[16384]{0}', space=vmem, size = 0x4000, scoped, tag = 'input window, operand 2']
    #allocation4 [shape = 's32[2]{0}', space=sflag, size = 0x8, scoped, tag = 'scoped memory for tpu_custom_call.1']
    #allocation5 [shape = 's32[2]{0}', space=sflag, size = 0x8, scoped, tag = 'scoped memory for tpu_custom_call.1']
    #allocation6 [shape = 'u8[4096]{0}', space=vmem, size = 0x1000, scoped, tag = 'output window, operand 0, single buffered']
    %10 = vsyncpa [#allocation4], 0
    %s11 = scalar_lea.sflag [#allocation4], 1
    %12 = vsyncpa %s11, 0
    %13 = vsyncpa [#allocation5], 0
    loop: start=0, step=1, limit=4
    $region2: #{tpu_custom_call.1} parent=1 // loop_pre_header
      _
    $region3: #{tpu_custom_call.1} parent=1 // loop_header
      %s15 = sphi 0, %s19
      %p16 = scmp.ge.s32.totalorder %s15, 4
      %s23 = sphi 0, %s23
      %s25 = sphi 0, %s23
      %s26 = sphi 0, %s25
      %s40 = sphi 0, %s26
      %s46 = sphi 0, %s48
      %s49 = sphi 0, %s46
      %s50 = sphi 0, %s49
      %s66 = sphi 0, %s50
      %s72 = sphi 0, %s74
      %s75 = sphi 0, %s72
      %s76 = sphi 0, %s75
      %s92 = sphi 0, %s76
      %s98 = sphi 0, %s100
      %s101 = sphi 0, %s98
      %s102 = sphi 0, %s101
      %s118 = sphi 0, %s102
      %s124 = sphi 0, %s126
      %s127 = sphi 0, %s124
      %s128 = sphi 0, %s127
      %s144 = sphi 0, %s128
      %s148 = sphi 0, %s148
      %s150 = sphi 0, %s148
      %s151 = sphi 0, %s150
      %s165 = sphi 0, %s151
    $region4: #{tpu_custom_call.1} parent=1 // loop_header_branch
      %18 = sbr.rel (%p16) target = $region8
    $region5: #{tpu_custom_call.1} parent=1 // loop_body
      %s20 = ssub.s32 %s15, 1
      %s21 = ssub.s32 %s15, 2
      %s22 = sadd.s32 %s15, 1
      %s24 = sadd.s32 %s23, 1
      %p27 = scmp.eq.s32.totalorder %s15, 1
      %p28 = scmp.ne.s32.totalorder %s23, %s25
      %p29 = scmp.eq.s32.totalorder %s15, 0
      %p30 = por %p28, %p29
      %p31 = scmp.ne.s32.totalorder %s23, %s25
      %p32 = scmp.eq.s32.totalorder %s20, 1
      %p33 = por %p31, %p32
      %p34 = scmp.ne.s32.totalorder %s25, %s26
      %p35 = scmp.eq.s32.totalorder %s20, 0
      %p36 = por %p34, %p35
      %p37 = scmp.ne.s32.totalorder %s25, %s26
      %p38 = scmp.eq.s32.totalorder %s21, 1
      %p39 = por %p37, %p38
      %p41 = scmp.ne.s32.totalorder %s26, %s40
      %p42 = scmp.eq.s32.totalorder %s21, 0
      %p43 = por %p41, %p42
      %s44 = ssub.s32 %s15, %s22
      %p45 = scmp.eq.s32.totalorder %s44, 0
      %s47 = sadd.s32 %s46, 1
      %s48 = scalar_select %p45, %s46, %s47
      %p51 = pneg %p45
      %p52 = scmp.eq.s32.totalorder %s15, 1
      %p53 = por %p51, %p52
      %p54 = scmp.ne.s32.totalorder %s46, %s49
      %p55 = scmp.eq.s32.totalorder %s15, 0
      %p56 = por %p54, %p55
      %p57 = scmp.ne.s32.totalorder %s46, %s49
      %p58 = scmp.eq.s32.totalorder %s20, 1
      %p59 = por %p57, %p58
      %p60 = scmp.ne.s32.totalorder %s49, %s50
      %p61 = scmp.eq.s32.totalorder %s20, 0
      %p62 = por %p60, %p61
      %p63 = scmp.ne.s32.totalorder %s49, %s50
      %p64 = scmp.eq.s32.totalorder %s21, 1
      %p65 = por %p63, %p64
      %p67 = scmp.ne.s32.totalorder %s50, %s66
      %p68 = scmp.eq.s32.totalorder %s21, 0
      %p69 = por %p67, %p68
      %s70 = ssub.s32 %s15, %s22
      %p71 = scmp.eq.s32.totalorder %s70, 0
      %s73 = sadd.s32 %s72, 1
      %s74 = scalar_select %p71, %s72, %s73
      %p77 = pneg %p71
      %p78 = scmp.eq.s32.totalorder %s15, 1
      %p79 = por %p77, %p78
      %p80 = scmp.ne.s32.totalorder %s72, %s75
      %p81 = scmp.eq.s32.totalorder %s15, 0
      %p82 = por %p80, %p81
      %p83 = scmp.ne.s32.totalorder %s72, %s75
      %p84 = scmp.eq.s32.totalorder %s20, 1
      %p85 = por %p83, %p84
      %p86 = scmp.ne.s32.totalorder %s75, %s76
      %p87 = scmp.eq.s32.totalorder %s20, 0
      %p88 = por %p86, %p87
      %p89 = scmp.ne.s32.totalorder %s75, %s76
      %p90 = scmp.eq.s32.totalorder %s21, 1
      %p91 = por %p89, %p90
      %p93 = scmp.ne.s32.totalorder %s76, %s92
      %p94 = scmp.eq.s32.totalorder %s21, 0
      %p95 = por %p93, %p94
      %s96 = ssub.s32 %s15, %s22
      %p97 = scmp.eq.s32.totalorder %s96, 0
      %s99 = sadd.s32 %s98, 1
      %s100 = scalar_select %p97, %s98, %s99
      %p103 = pneg %p97
      %p104 = scmp.eq.s32.totalorder %s15, 1
      %p105 = por %p103, %p104
      %p106 = scmp.ne.s32.totalorder %s98, %s101
      %p107 = scmp.eq.s32.totalorder %s15, 0
      %p108 = por %p106, %p107
      %p109 = scmp.ne.s32.totalorder %s98, %s101
      %p110 = scmp.eq.s32.totalorder %s20, 1
      %p111 = por %p109, %p110
      %p112 = scmp.ne.s32.totalorder %s101, %s102
      %p113 = scmp.eq.s32.totalorder %s20, 0
      %p114 = por %p112, %p113
      %p115 = scmp.ne.s32.totalorder %s101, %s102
      %p116 = scmp.eq.s32.totalorder %s21, 1
      %p117 = por %p115, %p116
      %p119 = scmp.ne.s32.totalorder %s102, %s118
      %p120 = scmp.eq.s32.totalorder %s21, 0
      %p121 = por %p119, %p120
      %s122 = ssub.s32 %s15, %s22
      %p123 = scmp.eq.s32.totalorder %s122, 0
      %s125 = sadd.s32 %s124, 1
      %s126 = scalar_select %p123, %s124, %s125
      %p129 = pneg %p123
      %p130 = scmp.eq.s32.totalorder %s15, 1
      %p131 = por %p129, %p130
      %p132 = scmp.ne.s32.totalorder %s124, %s127
      %p133 = scmp.eq.s32.totalorder %s15, 0
      %p134 = por %p132, %p133
      %p135 = scmp.ne.s32.totalorder %s124, %s127
      %p136 = scmp.eq.s32.totalorder %s20, 1
      %p137 = por %p135, %p136
      %p138 = scmp.ne.s32.totalorder %s127, %s128
      %p139 = scmp.eq.s32.totalorder %s20, 0
      %p140 = por %p138, %p139
      %p141 = scmp.ne.s32.totalorder %s127, %s128
      %p142 = scmp.eq.s32.totalorder %s21, 1
      %p143 = por %p141, %p142
      %p145 = scmp.ne.s32.totalorder %s128, %s144
      %p146 = scmp.eq.s32.totalorder %s21, 0
      %p147 = por %p145, %p146
      %s149 = sadd.s32 %s148, 1
      %p152 = scmp.eq.s32.totalorder %s15, 1
      %p153 = scmp.ne.s32.totalorder %s148, %s150
      %p154 = scmp.eq.s32.totalorder %s15, 0
      %p155 = por %p153, %p154
      %p156 = scmp.ne.s32.totalorder %s148, %s150
      %p157 = scmp.eq.s32.totalorder %s20, 1
      %p158 = por %p156, %p157
      %p159 = scmp.ne.s32.totalorder %s150, %s151
      %p160 = scmp.eq.s32.totalorder %s20, 0
      %p161 = por %p159, %p160
      %p162 = scmp.ne.s32.totalorder %s150, %s151
      %p163 = scmp.eq.s32.totalorder %s21, 1
      %p164 = por %p162, %p163
      %p166 = scmp.ne.s32.totalorder %s151, %s165
      %p167 = scmp.eq.s32.totalorder %s21, 0
      %p168 = por %p166, %p167
      %p169 = scmp.le.s32.totalorder 1, %s15
      %p170 = scmp.lt.s32.totalorder %s15, 3
      %p171 = pnand %p169, %p170
      %p172 = pneg %p171
      // Predicated region
      $region9: #{tpu_custom_call.1} parent=5 // pred_check
        _
      $region10: #{tpu_custom_call.1} parent=5 // pred_check_branch
        %174 = sbr.rel (%p171) target = $region12
      $region11: #{tpu_custom_call.1} parent=5 // pred_region
        %s175 = ssub.s32 %s15, 1
        // Predicated region
        $region13: #{tpu_custom_call.1} parent=11 // pred_check
          %p176 = pneg %p36
        $region14: #{tpu_custom_call.1} parent=11 // pred_check_branch
          %178 = sbr.rel (%p176) target = $region16
        $region15: #{tpu_custom_call.1} parent=11 // pred_region
          _
        $region16: #{tpu_custom_call.1} parent=11 // pred_fallthru
          _
      $region12: #{tpu_custom_call.1} parent=5 // pred_fallthru
        _
      %p179 = scmp.lt.s32.totalorder %s15, 2
      // Predicated region
      $region17: #{tpu_custom_call.1} parent=5 // pred_check
        %p180 = pneg %p179
      $region18: #{tpu_custom_call.1} parent=5 // pred_check_branch
        %182 = sbr.rel (%p180) target = $region20
      $region19: #{tpu_custom_call.1} parent=5 // pred_region
        // Predicated region
        $region21: #{tpu_custom_call.1} parent=19 // pred_check
          %p183 = pneg %p56
        $region22: #{tpu_custom_call.1} parent=19 // pred_check_branch
          %185 = sbr.rel (%p183) target = $region24
        $region23: #{tpu_custom_call.1} parent=19 // pred_region
          %p186 = scmp.lt.s32.totalorder %s15, 1
          %s187 = scalar_select %p186, %s15, 1
          %s188 = smul.addr %s187, 16
          %s189 = smul.addr %s188, 4
          %s190 = scalar_lea.vmem %s1, %s189
        $region24: #{tpu_custom_call.1} parent=19 // pred_fallthru
          _
        // Predicated region
        $region25: #{tpu_custom_call.1} parent=19 // pred_check
          %p191 = pneg %p82
        $region26: #{tpu_custom_call.1} parent=19 // pred_check_branch
          %193 = sbr.rel (%p191) target = $region28
        $region27: #{tpu_custom_call.1} parent=19 // pred_region
          %s194 = sand.u32 %s72, 1
          %s195 = scalar_lea.sflag [#allocation4], %s194
          %s196 = sand.u32 %s72, 1
          %s197 = smul.addr %s196, 16
          %s198 = scalar_lea.vmem [#allocation3], %s197
          %s200 = ssub.s32 256, 256
          %201 = vsyncadd %s195, %s200
          %s202 = smul.addr %s15, 4
          %s203 = smul.addr %s202, 64
          %s204 = scalar_lea.hbm %s2, %s203
          %s205 = sshll.u32 %s198, 4
          %s206 = int_to_ptr.vmem [resolvable:$true] %s205
          %211 = dma.hbm_to_vmem [thread:$0]  %s204, 256, %s206, %s195, 64, 64, 4
        $region28: #{tpu_custom_call.1} parent=19 // pred_fallthru
          _
        // Predicated region
        $region29: #{tpu_custom_call.1} parent=19 // pred_check
          %p212 = pneg %p108
        $region30: #{tpu_custom_call.1} parent=19 // pred_check_branch
          %214 = sbr.rel (%p212) target = $region32
        $region31: #{tpu_custom_call.1} parent=19 // pred_region
          %p215 = scmp.lt.s32.totalorder %s15, 1
          %s216 = scalar_select %p215, %s15, 1
          %s217 = smul.addr %s216, 8
          %s218 = smul.addr %s217, 4
          %s219 = scalar_lea.vmem %s3, %s218
        $region32: #{tpu_custom_call.1} parent=19 // pred_fallthru
          _
        // Predicated region
        $region33: #{tpu_custom_call.1} parent=19 // pred_check
          %p220 = pneg %p134
        $region34: #{tpu_custom_call.1} parent=19 // pred_check_branch
          %222 = sbr.rel (%p220) target = $region36
        $region35: #{tpu_custom_call.1} parent=19 // pred_region
          %p223 = scmp.lt.s32.totalorder %s15, 1
          %s224 = scalar_select %p223, %s15, 1
          %s225 = smul.addr %s224, 2
          %s226 = smul.addr %s225, 8
          %s227 = scalar_lea.vmem %s4, %s226
        $region36: #{tpu_custom_call.1} parent=19 // pred_fallthru
          _
      $region20: #{tpu_custom_call.1} parent=5 // pred_fallthru
        _
      %p228 = scmp.le.s32.totalorder 1, %s15
      %p229 = scmp.lt.s32.totalorder %s15, 3
      %p230 = pnand %p228, %p229
      %p231 = pneg %p230
      // Predicated region
      $region37: #{tpu_custom_call.1} parent=5 // pred_check
        _
      $region38: #{tpu_custom_call.1} parent=5 // pred_check_branch
        %233 = sbr.rel (%p230) target = $region40
      $region39: #{tpu_custom_call.1} parent=5 // pred_region
        %s234 = ssub.s32 %s15, 1
        %s235 = sand.u32 %s75, 1
        %s236 = scalar_lea.sflag [#allocation4], %s235
        %s237 = sand.u32 %s75, 1
        %s238 = smul.addr %s237, 16
        %s239 = scalar_lea.vmem [#allocation3], %s238
        // Predicated region
        $region41: #{tpu_custom_call.1} parent=39 // pred_check
          %p240 = pneg %p88
        $region42: #{tpu_custom_call.1} parent=39 // pred_check_branch
          %242 = sbr.rel (%p240) target = $region44
        $region43: #{tpu_custom_call.1} parent=39 // pred_region
          %243 = dma.done %s236, 256
        $region44: #{tpu_custom_call.1} parent=39 // pred_fallthru
          _
        %p244 = pneg %p36
        %p245 = pneg %p33
        %p246 = scmp.lt.s32.totalorder %s20, 1
        %s247 = scalar_select %p246, %s20, 1
        %s248 = smul.addr %s247, 16
        %s249 = smul.addr %s248, 4
        %s250 = scalar_lea.vmem %s1, %s249
        %p251 = pneg %p62
        %p252 = pneg %p59
        %s253 = sand.u32 %s75, 1
        %s254 = scalar_lea.sflag [#allocation4], %s253
        %s255 = sand.u32 %s75, 1
        %s256 = smul.addr %s255, 16
        %s257 = scalar_lea.vmem [#allocation3], %s256
        %p258 = pneg %p88
        %p259 = pneg %p85
        %p260 = scmp.lt.s32.totalorder %s20, 1
        %s261 = scalar_select %p260, %s20, 1
        %s262 = smul.addr %s261, 8
        %s263 = smul.addr %s262, 4
        %s264 = scalar_lea.vmem %s3, %s263
        %p265 = pneg %p114
        %p266 = pneg %p111
        %p267 = scmp.lt.s32.totalorder %s20, 1
        %s268 = scalar_select %p267, %s20, 1
        %s269 = smul.addr %s268, 2
        %s270 = smul.addr %s269, 8
        %s271 = scalar_lea.vmem %s4, %s270
        %p272 = pneg %p140
        %p273 = pneg %p137
        %p274 = pneg %p161
        %p275 = pneg %p158
        %p276 = scmp.lt.s32.totalorder %s20, 1
        %s277 = scalar_select %p276, %s20, 1
        %s278 = smul.addr %s277, 16
        %s279 = smul.addr %s278, 4
        %s280 = scalar_lea.vmem %s1, %s279
        %p281 = scmp.lt.s32.totalorder %s20, 1
        %s282 = scalar_select %p281, %s20, 1
        %s283 = smul.addr %s282, 8
        %s284 = smul.addr %s283, 4
        %s285 = scalar_lea.vmem %s3, %s284
        %p286 = scmp.lt.s32.totalorder %s20, 1
        %s287 = scalar_select %p286, %s20, 1
        %s288 = smul.addr %s287, 2
        %s289 = smul.addr %s288, 8
        %s290 = scalar_lea.vmem %s4, %s289
        %p292 = scmp.eq.s32.totalorder %s20, 0
        // Predicated region
        $region45: #{tpu_custom_call.1} parent=39 // pred_check
          %p293 = pneg %p292
        $region46: #{tpu_custom_call.1} parent=39 // pred_check_branch
          %295 = sbr.rel (%p293) target = $region48
        $region47: #{tpu_custom_call.1} parent=39 // pred_region
          %v296 = vld [vmem:[%s0] sm:$0xff]
          %vm297 = vcmask 261120
          %298 = vst.msk [vmem:[#allocation2] sm:$0xff] %vm297, %v296
        $region48: #{tpu_custom_call.1} parent=39 // pred_fallthru
          _
        %v299 = vld [vmem:[#allocation2] sm:$0xff]
        %v300 = vld [vmem:[%s290] sm:$0x1]
        %v301 = vld [vmem:[%s290 + $0x1] sm:$0x1]
        %v302 = vld [vmem:[%s290 + $0x2] sm:$0x1]
        %v303 = vld [vmem:[%s290 + $0x3] sm:$0x1]
        %v304 = vld [vmem:[%s290 + $0x4] sm:$0x1]
        %v305 = vld [vmem:[%s290 + $0x5] sm:$0x1]
        %v306 = vld [vmem:[%s290 + $0x6] sm:$0x1]
        %v307 = vld [vmem:[%s290 + $0x7] sm:$0x1]
        %v308 = vld [vmem:[%s290 + $0x8] sm:$0x1]
        %v309 = vld [vmem:[%s290 + $0x9] sm:$0x1]
        %v310 = vpack.c.bf16 %v299, %v299
        %v311 = vld [vmem:[%s280] sm:$0xf]
        %v312 = vld [vmem:[%s280 + $0x4] sm:$0xf]
        %v313 = vld [vmem:[%s280 + $0x8] sm:$0xf]
        %v314 = vld [vmem:[%s280 + $0xc] sm:$0xf]
        %v315 = vlaneseq
        %v316 = vshrl.u32 %v315, 7
        %v317 = vsub.s32 0, %v316
        %v318 = vrot.slane %v300, %v317
        %v323 = vunpack.c.l.b16 %v311
        %v324 = vunpack.c.l.b16 %v312
        %v325 = vunpack.c.l.b16 %v313
        %v326 = vunpack.c.l.b16 %v314
        %v327 = vpack.c.b16 %v324, %v323
        %v328 = vpack.c.b16 %v326, %v325
        %vm331 = vcmask 261120
        %v333 = vsel %vm331, %v310, 0
        %335 = vmatprep.subr.bf16.mxu0 0
        %336 = vmatpush1.bf16.msra.mxu0 %v327
        %337 = vmatprep.subr.bf16.mxu0 0
        %338 = vmatpush1.bf16.msra.mxu0 %v328
        %339 = vmatprep.subr.bf16.mxu0 0
        %340 = vmatpush1.bf16.msra.mxu0 0
        %341 = vmatprep.subr.bf16.mxu0 0
        %342 = vmatpush1.bf16.msra.mxu0 0
        %343 = vmatprep.subr.bf16.mxu0 0
        %344 = vmatpush1.bf16.msra.mxu0 0
        %345 = vmatprep.subr.bf16.mxu0 0
        %346 = vmatpush1.bf16.msra.mxu0 0
        %347 = vmatprep.subr.bf16.mxu0 0
        %348 = vmatpush1.bf16.msra.mxu0 0
        %349 = vmatprep.subr.bf16.mxu0 0
        %350 = vmatpush1.bf16.msra.mxu0 0
        %351 = vmatprep.subr.bf16.mxu0 0
        %352 = vmatpush1.bf16.msra.mxu0 0
        %353 = vmatprep.subr.bf16.mxu0 0
        %354 = vmatpush1.bf16.msra.mxu0 0
        %355 = vmatprep.subr.bf16.mxu0 0
        %356 = vmatpush1.bf16.msra.mxu0 0
        %357 = vmatprep.subr.bf16.mxu0 0
        %358 = vmatpush1.bf16.msra.mxu0 0
        %359 = vmatprep.subr.bf16.mxu0 0
        %360 = vmatpush1.bf16.msra.mxu0 0
        %361 = vmatprep.subr.bf16.mxu0 0
        %362 = vmatpush1.bf16.msra.mxu0 0
        %363 = vmatprep.subr.bf16.mxu0 0
        %364 = vmatpush1.bf16.msra.mxu0 0
        %365 = vmatprep.subr.bf16.mxu0 0
        %366 = vmatpush1.bf16.msra.mxu0 0
        %367 = vmatprep.mubr.bf16.mxu0 0
        %368 = vmatmul.mubr.bf16.gmra.mrb[0].mxu0 %v333
        %v369 = vpop.f32.mrb[0].mxu0
        %v370 = vadd.f32 %v318, %v369
        %v371 = vpop.f32.mrb[0].mxu0
        %v372 = vpop.f32.mrb[0].mxu0
        %v373 = vpop.f32.mrb[0].mxu0
        %374 = vdwg.mxu0
        %v375 = vmul.f32 %v370, 0.35355338
        %s376 = scalar_lea.vmem %s280, 16
        %v377 = vld [vmem:[%s376] sm:$0xf]
        %v378 = vld [vmem:[%s376 + $0x4] sm:$0xf]
        %v379 = vld [vmem:[%s376 + $0x8] sm:$0xf]
        %v380 = vld [vmem:[%s376 + $0xc] sm:$0xf]
        %v381 = vlaneseq
        %v382 = vshrl.u32 %v381, 7
        %v383 = vsub.s32 0, %v382
        %v384 = vrot.slane %v301, %v383
        %v389 = vunpack.c.l.b16 %v377
        %v390 = vunpack.c.l.b16 %v378
        %v391 = vunpack.c.l.b16 %v379
        %v392 = vunpack.c.l.b16 %v380
        %v393 = vpack.c.b16 %v390, %v389
        %v394 = vpack.c.b16 %v392, %v391
        %397 = vmatprep.subr.bf16.mxu0 0
        %398 = vmatpush1.bf16.msra.mxu0 %v393
        %399 = vmatprep.subr.bf16.mxu0 0
        %400 = vmatpush1.bf16.msra.mxu0 %v394
        %401 = vmatprep.subr.bf16.mxu0 0
        %402 = vmatpush1.bf16.msra.mxu0 0
        %403 = vmatprep.subr.bf16.mxu0 0
        %404 = vmatpush1.bf16.msra.mxu0 0
        %405 = vmatprep.subr.bf16.mxu0 0
        %406 = vmatpush1.bf16.msra.mxu0 0
        %407 = vmatprep.subr.bf16.mxu0 0
        %408 = vmatpush1.bf16.msra.mxu0 0
        %409 = vmatprep.subr.bf16.mxu0 0
        %410 = vmatpush1.bf16.msra.mxu0 0
        %411 = vmatprep.subr.bf16.mxu0 0
        %412 = vmatpush1.bf16.msra.mxu0 0
        %413 = vmatprep.subr.bf16.mxu0 0
        %414 = vmatpush1.bf16.msra.mxu0 0
        %415 = vmatprep.subr.bf16.mxu0 0
        %416 = vmatpush1.bf16.msra.mxu0 0
        %417 = vmatprep.subr.bf16.mxu0 0
        %418 = vmatpush1.bf16.msra.mxu0 0
        %419 = vmatprep.subr.bf16.mxu0 0
        %420 = vmatpush1.bf16.msra.mxu0 0
        %421 = vmatprep.subr.bf16.mxu0 0
        %422 = vmatpush1.bf16.msra.mxu0 0
        %423 = vmatprep.subr.bf16.mxu0 0
        %424 = vmatpush1.bf16.msra.mxu0 0
        %425 = vmatprep.subr.bf16.mxu0 0
        %426 = vmatpush1.bf16.msra.mxu0 0
        %427 = vmatprep.subr.bf16.mxu0 0
        %428 = vmatpush1.bf16.msra.mxu0 0
        %429 = vmatprep.mubr.bf16.mxu0 0
        %430 = vmatmul.mubr.bf16.gmra.mrb[0].mxu0 %v333
        %v431 = vpop.f32.mrb[0].mxu0
        %v432 = vadd.f32 %v384, %v431
        %v433 = vpop.f32.mrb[0].mxu0
        %v434 = vpop.f32.mrb[0].mxu0
        %v435 = vpop.f32.mrb[0].mxu0
        %436 = vdwg.mxu0
        %s437 = scalar_lea.vmem %s280, 32
        %v438 = vld [vmem:[%s437] sm:$0xf]
        %v439 = vld [vmem:[%s437 + $0x4] sm:$0xf]
        %v440 = vld [vmem:[%s437 + $0x8] sm:$0xf]
        %v441 = vld [vmem:[%s437 + $0xc] sm:$0xf]
        %v442 = vlaneseq
        %v443 = vshrl.u32 %v442, 7
        %v444 = vsub.s32 0, %v443
        %v445 = vrot.slane %v302, %v444
        %v450 = vunpack.c.l.b16 %v438
        %v451 = vunpack.c.l.b16 %v439
        %v452 = vunpack.c.l.b16 %v440
        %v453 = vunpack.c.l.b16 %v441
        %v454 = vpack.c.b16 %v451, %v450
        %v455 = vpack.c.b16 %v453, %v452
        %458 = vmatprep.subr.bf16.mxu0 0
        %459 = vmatpush1.bf16.msra.mxu0 %v454
        %460 = vmatprep.subr.bf16.mxu0 0
        %461 = vmatpush1.bf16.msra.mxu0 %v455
        %462 = vmatprep.subr.bf16.mxu0 0
        %463 = vmatpush1.bf16.msra.mxu0 0
        %464 = vmatprep.subr.bf16.mxu0 0
        %465 = vmatpush1.bf16.msra.mxu0 0
        %466 = vmatprep.subr.bf16.mxu0 0
        %467 = vmatpush1.bf16.msra.mxu0 0
        %468 = vmatprep.subr.bf16.mxu0 0
        %469 = vmatpush1.bf16.msra.mxu0 0
        %470 = vmatprep.subr.bf16.mxu0 0
        %471 = vmatpush1.bf16.msra.mxu0 0
        %472 = vmatprep.subr.bf16.mxu0 0
        %473 = vmatpush1.bf16.msra.mxu0 0
        %474 = vmatprep.subr.bf16.mxu0 0
        %475 = vmatpush1.bf16.msra.mxu0 0
        %476 = vmatprep.subr.bf16.mxu0 0
        %477 = vmatpush1.bf16.msra.mxu0 0
        %478 = vmatprep.subr.bf16.mxu0 0
        %479 = vmatpush1.bf16.msra.mxu0 0
        %480 = vmatprep.subr.bf16.mxu0 0
        %481 = vmatpush1.bf16.msra.mxu0 0
        %482 = vmatprep.subr.bf16.mxu0 0
        %483 = vmatpush1.bf16.msra.mxu0 0
        %484 = vmatprep.subr.bf16.mxu0 0
        %485 = vmatpush1.bf16.msra.mxu0 0
        %486 = vmatprep.subr.bf16.mxu0 0
        %487 = vmatpush1.bf16.msra.mxu0 0
        %488 = vmatprep.subr.bf16.mxu0 0
        %489 = vmatpush1.bf16.msra.mxu0 0
        %490 = vmatprep.mubr.bf16.mxu0 0
        %491 = vmatmul.mubr.bf16.gmra.mrb[0].mxu0 %v333
        %v492 = vpop.f32.mrb[0].mxu0
        %v493 = vadd.f32 %v445, %v492
        %v494 = vpop.f32.mrb[0].mxu0
        %v495 = vpop.f32.mrb[0].mxu0
        %v496 = vpop.f32.mrb[0].mxu0
        %497 = vdwg.mxu0
        %v498 = vpack.c.bf16 %v375, %v375
        %v499 = vpack.c.bf16 %v432, %v432
        %v500 = vpack.c.bf16 %v493, %v493
        %vm501 = vcmask 64512
        %v503 = vsel %vm501, %v498, 0
        %v506 = vsel %vm501, %v499, 0
        %508 = vmatprep.subr.bf16.mxu0 0
        %509 = vmatpush1.bf16.xpose.msra.mxu0 %v506
        %510 = vmatprep.subr.bf16.mxu0 0
        %511 = vmatpush1.bf16.xpose.msra.mxu0 0
        %512 = vmatprep.subr.bf16.mxu0 0
        %513 = vmatpush1.bf16.xpose.msra.mxu0 0
        %514 = vmatprep.subr.bf16.mxu0 0
        %515 = vmatpush1.bf16.xpose.msra.mxu0 0
        %516 = vmatprep.subr.bf16.mxu0 0
        %517 = vmatpush1.bf16.xpose.msra.mxu0 0
        %518 = vmatprep.subr.bf16.mxu0 0
        %519 = vmatpush1.bf16.xpose.msra.mxu0 0
        %520 = vmatprep.subr.bf16.mxu0 0
        %521 = vmatpush1.bf16.xpose.msra.mxu0 0
        %522 = vmatprep.subr.bf16.mxu0 0
        %523 = vmatpush1.bf16.xpose.msra.mxu0 0
        %524 = vmatprep.subr.bf16.mxu0 0
        %525 = vmatpush1.bf16.xpose.msra.mxu0 0
        %526 = vmatprep.subr.bf16.mxu0 0
        %527 = vmatpush1.bf16.xpose.msra.mxu0 0
        %528 = vmatprep.subr.bf16.mxu0 0
        %529 = vmatpush1.bf16.xpose.msra.mxu0 0
        %530 = vmatprep.subr.bf16.mxu0 0
        %531 = vmatpush1.bf16.xpose.msra.mxu0 0
        %532 = vmatprep.subr.bf16.mxu0 0
        %533 = vmatpush1.bf16.xpose.msra.mxu0 0
        %534 = vmatprep.subr.bf16.mxu0 0
        %535 = vmatpush1.bf16.xpose.msra.mxu0 0
        %536 = vmatprep.subr.bf16.mxu0 0
        %537 = vmatpush1.bf16.xpose.msra.mxu0 0
        %538 = vmatprep.subr.bf16.mxu0 0
        %539 = vmatpush1.bf16.xpose.msra.mxu0 0
        %540 = vmatprep.mubr.bf16.mxu0 0
        %541 = vmatmul.mubr.bf16.gmra.mrb[0].mxu0 %v503
        %v542 = vpop.f32.mrb[0].mxu0
        %v543 = vadd.f32 0.0, %v542
        %v544 = vpop.f32.mrb[0].mxu0
        %v545 = vpop.f32.mrb[0].mxu0
        %v546 = vpop.f32.mrb[0].mxu0
        %547 = vdwg.mxu0
        %v548 = vsel %vm501, %v543, -inf
        %549 = vmax.xlane.f32.xlu0 %v548
        %v550 = vpop.xlane.xlu0 %549
        %v551 = vsub.f32 %v543, %v550
        %v552 = vmul.f32 %v551, 1.442695
        %v553 = vpow.pop %v552
        %v554 = vsel %vm501, %v553, 0.0
        %555 = vadd.xlane.f32.xlu0 %v554
        %v556 = vpop.xlane.xlu0 %555
        %v557 = vpack.c.bf16 %v553, %v553
        %v559 = vsel %vm501, %v557, 0
        %vm561 = vcmask 1043456
        %v563 = vsel %vm561, %v500, 0
        %565 = vmatprep.subr.bf16.mxu0 0
        %566 = vmatpush1.bf16.msra.mxu0 %v563
        %567 = vmatprep.subr.bf16.mxu0 0
        %568 = vmatpush1.bf16.msra.mxu0 0
        %569 = vmatprep.subr.bf16.mxu0 0
        %570 = vmatpush1.bf16.msra.mxu0 0
        %571 = vmatprep.subr.bf16.mxu0 0
        %572 = vmatpush1.bf16.msra.mxu0 0
        %573 = vmatprep.subr.bf16.mxu0 0
        %574 = vmatpush1.bf16.msra.mxu0 0
        %575 = vmatprep.subr.bf16.mxu0 0
        %576 = vmatpush1.bf16.msra.mxu0 0
        %577 = vmatprep.subr.bf16.mxu0 0
        %578 = vmatpush1.bf16.msra.mxu0 0
        %579 = vmatprep.subr.bf16.mxu0 0
        %580 = vmatpush1.bf16.msra.mxu0 0
        %581 = vmatprep.subr.bf16.mxu0 0
        %582 = vmatpush1.bf16.msra.mxu0 0
        %583 = vmatprep.subr.bf16.mxu0 0
        %584 = vmatpush1.bf16.msra.mxu0 0
        %585 = vmatprep.subr.bf16.mxu0 0
        %586 = vmatpush1.bf16.msra.mxu0 0
        %587 = vmatprep.subr.bf16.mxu0 0
        %588 = vmatpush1.bf16.msra.mxu0 0
        %589 = vmatprep.subr.bf16.mxu0 0
        %590 = vmatpush1.bf16.msra.mxu0 0
        %591 = vmatprep.subr.bf16.mxu0 0
        %592 = vmatpush1.bf16.msra.mxu0 0
        %593 = vmatprep.subr.bf16.mxu0 0
        %594 = vmatpush1.bf16.msra.mxu0 0
        %595 = vmatprep.subr.bf16.mxu0 0
        %596 = vmatpush1.bf16.msra.mxu0 0
        %597 = vmatprep.mubr.bf16.mxu0 0
        %598 = vmatmul.mubr.bf16.gmra.mrb[0].mxu0 %v559
        %v599 = vpop.f32.mrb[0].mxu0
        %v600 = vadd.f32 0.0, %v599
        %v601 = vpop.f32.mrb[0].mxu0
        %v602 = vpop.f32.mrb[0].mxu0
        %v603 = vpop.f32.mrb[0].mxu0
        %604 = vdwg.mxu0
        %v605 = vrcp.pop %v556
        %v606 = vmul.f32 %v600, %v605
        %608 = vrot.lane.b32.xlu0 %v498, 120
        %v609 = vpop.permute.xlu0 %608
        %611 = vrot.lane.b32.xlu0 %v499, 120
        %v612 = vpop.permute.xlu0 %611
        %v614 = vsel %vm501, %v609, 0
        %v617 = vsel %vm501, %v612, 0
        %619 = vmatprep.subr.bf16.mxu0 0
        %620 = vmatpush1.bf16.xpose.msra.mxu0 %v617
        %621 = vmatprep.subr.bf16.mxu0 0
        %622 = vmatpush1.bf16.xpose.msra.mxu0 0
        %623 = vmatprep.subr.bf16.mxu0 0
        %624 = vmatpush1.bf16.xpose.msra.mxu0 0
        %625 = vmatprep.subr.bf16.mxu0 0
        %626 = vmatpush1.bf16.xpose.msra.mxu0 0
        %627 = vmatprep.subr.bf16.mxu0 0
        %628 = vmatpush1.bf16.xpose.msra.mxu0 0
        %629 = vmatprep.subr.bf16.mxu0 0
        %630 = vmatpush1.bf16.xpose.msra.mxu0 0
        %631 = vmatprep.subr.bf16.mxu0 0
        %632 = vmatpush1.bf16.xpose.msra.mxu0 0
        %633 = vmatprep.subr.bf16.mxu0 0
        %634 = vmatpush1.bf16.xpose.msra.mxu0 0
        %635 = vmatprep.subr.bf16.mxu0 0
        %636 = vmatpush1.bf16.xpose.msra.mxu0 0
        %637 = vmatprep.subr.bf16.mxu0 0
        %638 = vmatpush1.bf16.xpose.msra.mxu0 0
        %639 = vmatprep.subr.bf16.mxu0 0
        %640 = vmatpush1.bf16.xpose.msra.mxu0 0
        %641 = vmatprep.subr.bf16.mxu0 0
        %642 = vmatpush1.bf16.xpose.msra.mxu0 0
        %643 = vmatprep.subr.bf16.mxu0 0
        %644 = vmatpush1.bf16.xpose.msra.mxu0 0
        %645 = vmatprep.subr.bf16.mxu0 0
        %646 = vmatpush1.bf16.xpose.msra.mxu0 0
        %647 = vmatprep.subr.bf16.mxu0 0
        %648 = vmatpush1.bf16.xpose.msra.mxu0 0
        %649 = vmatprep.subr.bf16.mxu0 0
        %650 = vmatpush1.bf16.xpose.msra.mxu0 0
        %651 = vmatprep.mubr.bf16.mxu0 0
        %652 = vmatmul.mubr.bf16.gmra.mrb[0].mxu0 %v614
        %v653 = vpop.f32.mrb[0].mxu0
        %v654 = vadd.f32 0.0, %v653
        %v655 = vpop.f32.mrb[0].mxu0
        %v656 = vpop.f32.mrb[0].mxu0
        %v657 = vpop.f32.mrb[0].mxu0
        %658 = vdwg.mxu0
        %v659 = vsel %vm501, %v654, -inf
        %660 = vmax.xlane.f32.xlu0 %v659
        %v661 = vpop.xlane.xlu0 %660
        %v662 = vsub.f32 %v654, %v661
        %v663 = vmul.f32 %v662, 1.442695
        %v664 = vpow.pop %v663
        %v665 = vsel %vm501, %v664, 0.0
        %666 = vadd.xlane.f32.xlu0 %v665
        %v667 = vpop.xlane.xlu0 %666
        %v668 = vpack.c.bf16 %v664, %v664
        %670 = vrot.lane.b32.xlu0 %v500, 120
        %v671 = vpop.permute.xlu0 %670
        %v673 = vsel %vm501, %v668, 0
        %v676 = vsel %vm561, %v671, 0
        %678 = vmatprep.subr.bf16.mxu0 0
        %679 = vmatpush1.bf16.msra.mxu0 %v676
        %680 = vmatprep.subr.bf16.mxu0 0
        %681 = vmatpush1.bf16.msra.mxu0 0
        %682 = vmatprep.subr.bf16.mxu0 0
        %683 = vmatpush1.bf16.msra.mxu0 0
        %684 = vmatprep.subr.bf16.mxu0 0
        %685 = vmatpush1.bf16.msra.mxu0 0
        %686 = vmatprep.subr.bf16.mxu0 0
        %687 = vmatpush1.bf16.msra.mxu0 0
        %688 = vmatprep.subr.bf16.mxu0 0
        %689 = vmatpush1.bf16.msra.mxu0 0
        %690 = vmatprep.subr.bf16.mxu0 0
        %691 = vmatpush1.bf16.msra.mxu0 0
        %692 = vmatprep.subr.bf16.mxu0 0
        %693 = vmatpush1.bf16.msra.mxu0 0
        %694 = vmatprep.subr.bf16.mxu0 0
        %695 = vmatpush1.bf16.msra.mxu0 0
        %696 = vmatprep.subr.bf16.mxu0 0
        %697 = vmatpush1.bf16.msra.mxu0 0
        %698 = vmatprep.subr.bf16.mxu0 0
        %699 = vmatpush1.bf16.msra.mxu0 0
        %700 = vmatprep.subr.bf16.mxu0 0
        %701 = vmatpush1.bf16.msra.mxu0 0
        %702 = vmatprep.subr.bf16.mxu0 0
        %703 = vmatpush1.bf16.msra.mxu0 0
        %704 = vmatprep.subr.bf16.mxu0 0
        %705 = vmatpush1.bf16.msra.mxu0 0
        %706 = vmatprep.subr.bf16.mxu0 0
        %707 = vmatpush1.bf16.msra.mxu0 0
        %708 = vmatprep.subr.bf16.mxu0 0
        %709 = vmatpush1.bf16.msra.mxu0 0
        %710 = vmatprep.mubr.bf16.mxu0 0
        %711 = vmatmul.mubr.bf16.gmra.mrb[0].mxu0 %v673
        %v712 = vpop.f32.mrb[0].mxu0
        %v713 = vadd.f32 0.0, %v712
        %v714 = vpop.f32.mrb[0].mxu0
        %v715 = vpop.f32.mrb[0].mxu0
        %v716 = vpop.f32.mrb[0].mxu0
        %717 = vdwg.mxu0
        %v718 = vrcp.pop %v667
        %v719 = vmul.f32 %v713, %v718
        %720 = vrot.lane.b32.xlu0 %v498, 112
        %v721 = vpop.permute.xlu0 %720
        %722 = vrot.lane.b32.xlu0 %v499, 112
        %v723 = vpop.permute.xlu0 %722
        %v725 = vsel %vm501, %v721, 0
        %v728 = vsel %vm501, %v723, 0
        %730 = vmatprep.subr.bf16.mxu0 0
        %731 = vmatpush1.bf16.xpose.msra.mxu0 %v728
        %732 = vmatprep.subr.bf16.mxu0 0
        %733 = vmatpush1.bf16.xpose.msra.mxu0 0
        %734 = vmatprep.subr.bf16.mxu0 0
        %735 = vmatpush1.bf16.xpose.msra.mxu0 0
        %736 = vmatprep.subr.bf16.mxu0 0
        %737 = vmatpush1.bf16.xpose.msra.mxu0 0
        %738 = vmatprep.subr.bf16.mxu0 0
        %739 = vmatpush1.bf16.xpose.msra.mxu0 0
        %740 = vmatprep.subr.bf16.mxu0 0
        %741 = vmatpush1.bf16.xpose.msra.mxu0 0
        %742 = vmatprep.subr.bf16.mxu0 0
        %743 = vmatpush1.bf16.xpose.msra.mxu0 0
        %744 = vmatprep.subr.bf16.mxu0 0
        %745 = vmatpush1.bf16.xpose.msra.mxu0 0
        %746 = vmatprep.subr.bf16.mxu0 0
        %747 = vmatpush1.bf16.xpose.msra.mxu0 0
        %748 = vmatprep.subr.bf16.mxu0 0
        %749 = vmatpush1.bf16.xpose.msra.mxu0 0
        %750 = vmatprep.subr.bf16.mxu0 0
        %751 = vmatpush1.bf16.xpose.msra.mxu0 0
        %752 = vmatprep.subr.bf16.mxu0 0
        %753 = vmatpush1.bf16.xpose.msra.mxu0 0
        %754 = vmatprep.subr.bf16.mxu0 0
        %755 = vmatpush1.bf16.xpose.msra.mxu0 0
        %756 = vmatprep.subr.bf16.mxu0 0
        %757 = vmatpush1.bf16.xpose.msra.mxu0 0
        %758 = vmatprep.subr.bf16.mxu0 0
        %759 = vmatpush1.bf16.xpose.msra.mxu0 0
        %760 = vmatprep.subr.bf16.mxu0 0
        %761 = vmatpush1.bf16.xpose.msra.mxu0 0
        %762 = vmatprep.mubr.bf16.mxu0 0
        %763 = vmatmul.mubr.bf16.gmra.mrb[0].mxu0 %v725
        %v764 = vpop.f32.mrb[0].mxu0
        %v765 = vadd.f32 0.0, %v764
        %v766 = vpop.f32.mrb[0].mxu0
        %v767 = vpop.f32.mrb[0].mxu0
        %v768 = vpop.f32.mrb[0].mxu0
        %769 = vdwg.mxu0
        %v770 = vsel %vm501, %v765, -inf
        %771 = vmax.xlane.f32.xlu0 %v770
        %v772 = vpop.xlane.xlu0 %771
        %v773 = vsub.f32 %v765, %v772
        %v774 = vmul.f32 %v773, 1.442695
        %v775 = vpow.pop %v774
        %v776 = vsel %vm501, %v775, 0.0
        %777 = vadd.xlane.f32.xlu0 %v776
        %v778 = vpop.xlane.xlu0 %777
        %v779 = vpack.c.bf16 %v775, %v775
        %780 = vrot.lane.b32.xlu0 %v500, 112
        %v781 = vpop.permute.xlu0 %780
        %v783 = vsel %vm501, %v779, 0
        %v786 = vsel %vm561, %v781, 0
        %788 = vmatprep.subr.bf16.mxu0 0
        %789 = vmatpush1.bf16.msra.mxu0 %v786
        %790 = vmatprep.subr.bf16.mxu0 0
        %791 = vmatpush1.bf16.msra.mxu0 0
        %792 = vmatprep.subr.bf16.mxu0 0
        %793 = vmatpush1.bf16.msra.mxu0 0
        %794 = vmatprep.subr.bf16.mxu0 0
        %795 = vmatpush1.bf16.msra.mxu0 0
        %796 = vmatprep.subr.bf16.mxu0 0
        %797 = vmatpush1.bf16.msra.mxu0 0
        %798 = vmatprep.subr.bf16.mxu0 0
        %799 = vmatpush1.bf16.msra.mxu0 0
        %800 = vmatprep.subr.bf16.mxu0 0
        %801 = vmatpush1.bf16.msra.mxu0 0
        %802 = vmatprep.subr.bf16.mxu0 0
        %803 = vmatpush1.bf16.msra.mxu0 0
        %804 = vmatprep.subr.bf16.mxu0 0
        %805 = vmatpush1.bf16.msra.mxu0 0
        %806 = vmatprep.subr.bf16.mxu0 0
        %807 = vmatpush1.bf16.msra.mxu0 0
        %808 = vmatprep.subr.bf16.mxu0 0
        %809 = vmatpush1.bf16.msra.mxu0 0
        %810 = vmatprep.subr.bf16.mxu0 0
        %811 = vmatpush1.bf16.msra.mxu0 0
        %812 = vmatprep.subr.bf16.mxu0 0
        %813 = vmatpush1.bf16.msra.mxu0 0
        %814 = vmatprep.subr.bf16.mxu0 0
        %815 = vmatpush1.bf16.msra.mxu0 0
        %816 = vmatprep.subr.bf16.mxu0 0
        %817 = vmatpush1.bf16.msra.mxu0 0
        %818 = vmatprep.subr.bf16.mxu0 0
        %819 = vmatpush1.bf16.msra.mxu0 0
        %820 = vmatprep.mubr.bf16.mxu0 0
        %821 = vmatmul.mubr.bf16.gmra.mrb[0].mxu0 %v783
        %v822 = vpop.f32.mrb[0].mxu0
        %v823 = vadd.f32 0.0, %v822
        %v824 = vpop.f32.mrb[0].mxu0
        %v825 = vpop.f32.mrb[0].mxu0
        %v826 = vpop.f32.mrb[0].mxu0
        %827 = vdwg.mxu0
        %v828 = vrcp.pop %v778
        %v829 = vmul.f32 %v823, %v828
        %830 = vrot.lane.b32.xlu0 %v498, 104
        %v831 = vpop.permute.xlu0 %830
        %832 = vrot.lane.b32.xlu0 %v499, 104
        %v833 = vpop.permute.xlu0 %832
        %v835 = vsel %vm501, %v831, 0
        %v838 = vsel %vm501, %v833, 0
        %840 = vmatprep.subr.bf16.mxu0 0
        %841 = vmatpush1.bf16.xpose.msra.mxu0 %v838
        %842 = vmatprep.subr.bf16.mxu0 0
        %843 = vmatpush1.bf16.xpose.msra.mxu0 0
        %844 = vmatprep.subr.bf16.mxu0 0
        %845 = vmatpush1.bf16.xpose.msra.mxu0 0
        %846 = vmatprep.subr.bf16.mxu0 0
        %847 = vmatpush1.bf16.xpose.msra.mxu0 0
        %848 = vmatprep.subr.bf16.mxu0 0
        %849 = vmatpush1.bf16.xpose.msra.mxu0 0
        %850 = vmatprep.subr.bf16.mxu0 0
        %851 = vmatpush1.bf16.xpose.msra.mxu0 0
        %852 = vmatprep.subr.bf16.mxu0 0
        %853 = vmatpush1.bf16.xpose.msra.mxu0 0
        %854 = vmatprep.subr.bf16.mxu0 0
        %855 = vmatpush1.bf16.xpose.msra.mxu0 0
        %856 = vmatprep.subr.bf16.mxu0 0
        %857 = vmatpush1.bf16.xpose.msra.mxu0 0
        %858 = vmatprep.subr.bf16.mxu0 0
        %859 = vmatpush1.bf16.xpose.msra.mxu0 0
        %860 = vmatprep.subr.bf16.mxu0 0
        %861 = vmatpush1.bf16.xpose.msra.mxu0 0
        %862 = vmatprep.subr.bf16.mxu0 0
        %863 = vmatpush1.bf16.xpose.msra.mxu0 0
        %864 = vmatprep.subr.bf16.mxu0 0
        %865 = vmatpush1.bf16.xpose.msra.mxu0 0
        %866 = vmatprep.subr.bf16.mxu0 0
        %867 = vmatpush1.bf16.xpose.msra.mxu0 0
        %868 = vmatprep.subr.bf16.mxu0 0
        %869 = vmatpush1.bf16.xpose.msra.mxu0 0
        %870 = vmatprep.subr.bf16.mxu0 0
        %871 = vmatpush1.bf16.xpose.msra.mxu0 0
        %872 = vmatprep.mubr.bf16.mxu0 0
        %873 = vmatmul.mubr.bf16.gmra.mrb[0].mxu0 %v835
        %v874 = vpop.f32.mrb[0].mxu0
        %v875 = vadd.f32 0.0, %v874
        %v876 = vpop.f32.mrb[0].mxu0
        %v877 = vpop.f32.mrb[0].mxu0
        %v878 = vpop.f32.mrb[0].mxu0
        %879 = vdwg.mxu0
        %v880 = vsel %vm501, %v875, -inf
        %881 = vmax.xlane.f32.xlu0 %v880
        %v882 = vpop.xlane.xlu0 %881
        %v883 = vsub.f32 %v875, %v882
        %v884 = vmul.f32 %v883, 1.442695
        %v885 = vpow.pop %v884
        %v886 = vsel %vm501, %v885, 0.0
        %887 = vadd.xlane.f32.xlu0 %v886
        %v888 = vpop.xlane.xlu0 %887
        %v889 = vpack.c.bf16 %v885, %v885
        %890 = vrot.lane.b32.xlu0 %v500, 104
        %v891 = vpop.permute.xlu0 %890
        %v893 = vsel %vm501, %v889, 0
        %v896 = vsel %vm561, %v891, 0
        %898 = vmatprep.subr.bf16.mxu0 0
        %899 = vmatpush1.bf16.msra.mxu0 %v896
        %900 = vmatprep.subr.bf16.mxu0 0
        %901 = vmatpush1.bf16.msra.mxu0 0
        %902 = vmatprep.subr.bf16.mxu0 0
        %903 = vmatpush1.bf16.msra.mxu0 0
        %904 = vmatprep.subr.bf16.mxu0 0
        %905 = vmatpush1.bf16.msra.mxu0 0
        %906 = vmatprep.subr.bf16.mxu0 0
        %907 = vmatpush1.bf16.msra.mxu0 0
        %908 = vmatprep.subr.bf16.mxu0 0
        %909 = vmatpush1.bf16.msra.mxu0 0
        %910 = vmatprep.subr.bf16.mxu0 0
        %911 = vmatpush1.bf16.msra.mxu0 0
        %912 = vmatprep.subr.bf16.mxu0 0
        %913 = vmatpush1.bf16.msra.mxu0 0
        %914 = vmatprep.subr.bf16.mxu0 0
        %915 = vmatpush1.bf16.msra.mxu0 0
        %916 = vmatprep.subr.bf16.mxu0 0
        %917 = vmatpush1.bf16.msra.mxu0 0
        %918 = vmatprep.subr.bf16.mxu0 0
        %919 = vmatpush1.bf16.msra.mxu0 0
        %920 = vmatprep.subr.bf16.mxu0 0
        %921 = vmatpush1.bf16.msra.mxu0 0
        %922 = vmatprep.subr.bf16.mxu0 0
        %923 = vmatpush1.bf16.msra.mxu0 0
        %924 = vmatprep.subr.bf16.mxu0 0
        %925 = vmatpush1.bf16.msra.mxu0 0
        %926 = vmatprep.subr.bf16.mxu0 0
        %927 = vmatpush1.bf16.msra.mxu0 0
        %928 = vmatprep.subr.bf16.mxu0 0
        %929 = vmatpush1.bf16.msra.mxu0 0
        %930 = vmatprep.mubr.bf16.mxu0 0
        %931 = vmatmul.mubr.bf16.gmra.mrb[0].mxu0 %v893
        %v932 = vpop.f32.mrb[0].mxu0
        %v933 = vadd.f32 0.0, %v932
        %v934 = vpop.f32.mrb[0].mxu0
        %v935 = vpop.f32.mrb[0].mxu0
        %v936 = vpop.f32.mrb[0].mxu0
        %937 = vdwg.mxu0
        %v938 = vrcp.pop %v888
        %v939 = vmul.f32 %v933, %v938
        %941 = vrot.lane.b32.xlu0 %v719, 8
        %v942 = vpop.permute.xlu0 %941
        %945 = vrot.lane.b32.xlu0 %v829, 16
        %v946 = vpop.permute.xlu0 %945
        %949 = vrot.lane.b32.xlu0 %v939, 24
        %v950 = vpop.permute.xlu0 %949
        %v952 = vsel %vm501, %v606, %v942
        %vm953 = vcmask 130048
        %v954 = vsel %vm953, %v952, %v946
        %vm955 = vcmask 195584
        %v956 = vsel %vm955, %v954, %v950
        %v957 = vpack.c.bf16 %v956, %v956
        %s958 = scalar_lea.vmem %s280, 48
        %v959 = vld [vmem:[%s958] sm:$0xf]
        %v960 = vld [vmem:[%s958 + $0x4] sm:$0xf]
        %v961 = vld [vmem:[%s958 + $0x8] sm:$0xf]
        %v962 = vld [vmem:[%s958 + $0xc] sm:$0xf]
        %v963 = vlaneseq
        %v964 = vshrl.u32 %v963, 7
        %v965 = vsub.s32 0, %v964
        %v966 = vrot.slane %v303, %v965
        %v971 = vunpack.c.l.b16 %v959
        %v972 = vunpack.c.l.b16 %v960
        %v973 = vunpack.c.l.b16 %v961
        %v974 = vunpack.c.l.b16 %v962
        %v975 = vpack.c.b16 %v972, %v971
        %v976 = vpack.c.b16 %v974, %v973
        %v980 = vsel %vm331, %v957, 0
        %982 = vmatprep.subr.bf16.mxu0 0
        %983 = vmatpush1.bf16.msra.mxu0 %v975
        %984 = vmatprep.subr.bf16.mxu0 0
        %985 = vmatpush1.bf16.msra.mxu0 %v976
        %986 = vmatprep.subr.bf16.mxu0 0
        %987 = vmatpush1.bf16.msra.mxu0 0
        %988 = vmatprep.subr.bf16.mxu0 0
        %989 = vmatpush1.bf16.msra.mxu0 0
        %990 = vmatprep.subr.bf16.mxu0 0
        %991 = vmatpush1.bf16.msra.mxu0 0
        %992 = vmatprep.subr.bf16.mxu0 0
        %993 = vmatpush1.bf16.msra.mxu0 0
        %994 = vmatprep.subr.bf16.mxu0 0
        %995 = vmatpush1.bf16.msra.mxu0 0
        %996 = vmatprep.subr.bf16.mxu0 0
        %997 = vmatpush1.bf16.msra.mxu0 0
        %998 = vmatprep.subr.bf16.mxu0 0
        %999 = vmatpush1.bf16.msra.mxu0 0
        %1000 = vmatprep.subr.bf16.mxu0 0
        %1001 = vmatpush1.bf16.msra.mxu0 0
        %1002 = vmatprep.subr.bf16.mxu0 0
        %1003 = vmatpush1.bf16.msra.mxu0 0
        %1004 = vmatprep.subr.bf16.mxu0 0
        %1005 = vmatpush1.bf16.msra.mxu0 0
        %1006 = vmatprep.subr.bf16.mxu0 0
        %1007 = vmatpush1.bf16.msra.mxu0 0
        %1008 = vmatprep.subr.bf16.mxu0 0
        %1009 = vmatpush1.bf16.msra.mxu0 0
        %1010 = vmatprep.subr.bf16.mxu0 0
        %1011 = vmatpush1.bf16.msra.mxu0 0
        %1012 = vmatprep.subr.bf16.mxu0 0
        %1013 = vmatpush1.bf16.msra.mxu0 0
        %1014 = vmatprep.mubr.bf16.mxu0 0
        %1015 = vmatmul.mubr.bf16.gmra.mrb[0].mxu0 %v980
        %v1016 = vpop.f32.mrb[0].mxu0
        %v1017 = vadd.f32 %v966, %v1016
        %v1018 = vpop.f32.mrb[0].mxu0
        %v1019 = vpop.f32.mrb[0].mxu0
        %v1020 = vpop.f32.mrb[0].mxu0
        %1021 = vdwg.mxu0
        %v1022 = vadd.f32 %v1017, %v299
        %v1023 = vsel %vm331, %v1022, 0.0
        %1024 = vadd.xlane.f32.xlu0 %v1023
        %v1025 = vpop.xlane.xlu0 %1024
        %v1026 = vrcp.pop 32.0
        %v1027 = vmul.f32 %v1025, %v1026
        %v1028 = vsub.f32 %v1022, %v1027
        %v1029 = vmul.f32 %v1028, %v1028
        %v1030 = vsel %vm331, %v1029, 0.0
        %1031 = vadd.xlane.f32.xlu0 %v1030
        %v1032 = vpop.xlane.xlu0 %1031
        %v1033 = vmul.f32 %v1032, %v1026
        %v1034 = vadd.f32 %v1033, 1e-05
        %v1035 = vrsqrt.pop %v1034
        %v1036 = vmul.f32 %v1028, %v1035
        %v1037 = vlaneseq
        %v1038 = vshrl.u32 %v1037, 7
        %v1039 = vsub.s32 0, %v1038
        %v1040 = vrot.slane %v306, %v1039
        %v1041 = vmul.f32 %v1036, %v1040
        %v1042 = vlaneseq
        %v1043 = vshrl.u32 %v1042, 7
        %v1044 = vsub.s32 0, %v1043
        %v1045 = vrot.slane %v307, %v1044
        %v1046 = vadd.f32 %v1041, %v1045
        %v1047 = vpack.c.bf16 %v1046, %v1046
        %v1048 = vld [vmem:[%s239] sm:$0xf]
        %v1049 = vld [vmem:[%s239 + $0x4] sm:$0xf]
        %v1050 = vld [vmem:[%s239 + $0x8] sm:$0xf]
        %v1051 = vld [vmem:[%s239 + $0xc] sm:$0xf]
        %v1052 = vlaneseq
        %v1053 = vshrl.u32 %v1052, 7
        %v1054 = vsub.s32 0, %v1053
        %v1055 = vrot.slane %v304, %v1054
        %v1060 = vunpack.c.l.b16 %v1048
        %v1061 = vunpack.c.l.b16 %v1049
        %v1062 = vunpack.c.l.b16 %v1050
        %v1063 = vunpack.c.l.b16 %v1051
        %v1064 = vpack.c.b16 %v1061, %v1060
        %v1065 = vpack.c.b16 %v1063, %v1062
        %v1069 = vsel %vm331, %v1047, 0
        %1071 = vmatprep.subr.bf16.mxu0 0
        %1072 = vmatpush1.bf16.msra.mxu0 %v1064
        %1073 = vmatprep.subr.bf16.mxu0 0
        %1074 = vmatpush1.bf16.msra.mxu0 %v1065
        %1075 = vmatprep.subr.bf16.mxu0 0
        %1076 = vmatpush1.bf16.msra.mxu0 0
        %1077 = vmatprep.subr.bf16.mxu0 0
        %1078 = vmatpush1.bf16.msra.mxu0 0
        %1079 = vmatprep.subr.bf16.mxu0 0
        %1080 = vmatpush1.bf16.msra.mxu0 0
        %1081 = vmatprep.subr.bf16.mxu0 0
        %1082 = vmatpush1.bf16.msra.mxu0 0
        %1083 = vmatprep.subr.bf16.mxu0 0
        %1084 = vmatpush1.bf16.msra.mxu0 0
        %1085 = vmatprep.subr.bf16.mxu0 0
        %1086 = vmatpush1.bf16.msra.mxu0 0
        %1087 = vmatprep.subr.bf16.mxu0 0
        %1088 = vmatpush1.bf16.msra.mxu0 0
        %1089 = vmatprep.subr.bf16.mxu0 0
        %1090 = vmatpush1.bf16.msra.mxu0 0
        %1091 = vmatprep.subr.bf16.mxu0 0
        %1092 = vmatpush1.bf16.msra.mxu0 0
        %1093 = vmatprep.subr.bf16.mxu0 0
        %1094 = vmatpush1.bf16.msra.mxu0 0
        %1095 = vmatprep.subr.bf16.mxu0 0
        %1096 = vmatpush1.bf16.msra.mxu0 0
        %1097 = vmatprep.subr.bf16.mxu0 0
        %1098 = vmatpush1.bf16.msra.mxu0 0
        %1099 = vmatprep.subr.bf16.mxu0 0
        %1100 = vmatpush1.bf16.msra.mxu0 0
        %1101 = vmatprep.subr.bf16.mxu0 0
        %1102 = vmatpush1.bf16.msra.mxu0 0
        %1103 = vmatprep.mubr.bf16.mxu0 0
        %1104 = vmatmul.mubr.bf16.gmra.mrb[0].mxu0 %v1069
        %v1105 = vpop.f32.mrb[0].mxu0
        %v1106 = vadd.f32 %v1055, %v1105
        %v1107 = vpop.f32.mrb[0].mxu0
        %v1108 = vpop.f32.mrb[0].mxu0
        %v1109 = vpop.f32.mrb[0].mxu0
        %1110 = vdwg.mxu0
        %v1111 = vmax.f32 %v1106, 0.0
        %v1112 = vpack.c.bf16 %v1111, %v1111
        %v1113 = vld [vmem:[%s285] sm:$0xf]
        %v1114 = vld [vmem:[%s285 + $0x4] sm:$0xf]
        %v1115 = vld [vmem:[%s285 + $0x8] sm:$0xf]
        %v1116 = vld [vmem:[%s285 + $0xc] sm:$0xf]
        %v1117 = vld [vmem:[%s285 + $0x10] sm:$0xf]
        %v1118 = vld [vmem:[%s285 + $0x14] sm:$0xf]
        %v1119 = vld [vmem:[%s285 + $0x18] sm:$0xf]
        %v1120 = vld [vmem:[%s285 + $0x1c] sm:$0xf]
        %v1121 = vlaneseq
        %v1122 = vshrl.u32 %v1121, 7
        %v1123 = vsub.s32 0, %v1122
        %v1124 = vrot.slane %v305, %v1123
        %v1133 = vunpack.c.l.b16 %v1113
        %v1134 = vunpack.c.l.b16 %v1114
        %v1135 = vunpack.c.l.b16 %v1115
        %v1136 = vunpack.c.l.b16 %v1116
        %v1137 = vunpack.c.l.b16 %v1117
        %v1138 = vunpack.c.l.b16 %v1118
        %v1139 = vunpack.c.l.b16 %v1119
        %v1140 = vunpack.c.l.b16 %v1120
        %v1141 = vpack.c.b16 %v1134, %v1133
        %v1142 = vpack.c.b16 %v1136, %v1135
        %v1143 = vpack.c.b16 %v1138, %v1137
        %v1144 = vpack.c.b16 %v1140, %v1139
        %vm1149 = vcmask 523264
        %v1151 = vsel %vm1149, %v1112, 0
        %1153 = vmatprep.subr.bf16.mxu0 0
        %1154 = vmatpush1.bf16.msra.mxu0 %v1141
        %1155 = vmatprep.subr.bf16.mxu0 0
        %1156 = vmatpush1.bf16.msra.mxu0 %v1142
        %1157 = vmatprep.subr.bf16.mxu0 0
        %1158 = vmatpush1.bf16.msra.mxu0 %v1143
        %1159 = vmatprep.subr.bf16.mxu0 0
        %1160 = vmatpush1.bf16.msra.mxu0 %v1144
        %1161 = vmatprep.subr.bf16.mxu0 0
        %1162 = vmatpush1.bf16.msra.mxu0 0
        %1163 = vmatprep.subr.bf16.mxu0 0
        %1164 = vmatpush1.bf16.msra.mxu0 0
        %1165 = vmatprep.subr.bf16.mxu0 0
        %1166 = vmatpush1.bf16.msra.mxu0 0
        %1167 = vmatprep.subr.bf16.mxu0 0
        %1168 = vmatpush1.bf16.msra.mxu0 0
        %1169 = vmatprep.subr.bf16.mxu0 0
        %1170 = vmatpush1.bf16.msra.mxu0 0
        %1171 = vmatprep.subr.bf16.mxu0 0
        %1172 = vmatpush1.bf16.msra.mxu0 0
        %1173 = vmatprep.subr.bf16.mxu0 0
        %1174 = vmatpush1.bf16.msra.mxu0 0
        %1175 = vmatprep.subr.bf16.mxu0 0
        %1176 = vmatpush1.bf16.msra.mxu0 0
        %1177 = vmatprep.subr.bf16.mxu0 0
        %1178 = vmatpush1.bf16.msra.mxu0 0
        %1179 = vmatprep.subr.bf16.mxu0 0
        %1180 = vmatpush1.bf16.msra.mxu0 0
        %1181 = vmatprep.subr.bf16.mxu0 0
        %1182 = vmatpush1.bf16.msra.mxu0 0
        %1183 = vmatprep.subr.bf16.mxu0 0
        %1184 = vmatpush1.bf16.msra.mxu0 0
        %1185 = vmatprep.mubr.bf16.mxu0 0
        %1186 = vmatmul.mubr.bf16.gmra.mrb[0].mxu0 %v1151
        %v1187 = vpop.f32.mrb[0].mxu0
        %v1188 = vadd.f32 %v1124, %v1187
        %v1189 = vpop.f32.mrb[0].mxu0
        %v1190 = vpop.f32.mrb[0].mxu0
        %v1191 = vpop.f32.mrb[0].mxu0
        %1192 = vdwg.mxu0
        %v1193 = vadd.f32 %v1046, %v1188
        %v1194 = vsel %vm331, %v1193, 0.0
        %1195 = vadd.xlane.f32.xlu0 %v1194
        %v1196 = vpop.xlane.xlu0 %1195
        %v1197 = vmul.f32 %v1196, %v1026
        %v1198 = vsub.f32 %v1193, %v1197
        %v1199 = vmul.f32 %v1198, %v1198
        %v1200 = vsel %vm331, %v1199, 0.0
        %1201 = vadd.xlane.f32.xlu0 %v1200
        %v1202 = vpop.xlane.xlu0 %1201
        %v1203 = vmul.f32 %v1202, %v1026
        %v1204 = vadd.f32 %v1203, 1e-05
        %v1205 = vrsqrt.pop %v1204
        %v1206 = vmul.f32 %v1198, %v1205
        %v1207 = vlaneseq
        %v1208 = vshrl.u32 %v1207, 7
        %v1209 = vsub.s32 0, %v1208
        %v1210 = vrot.slane %v308, %v1209
        %v1211 = vmul.f32 %v1206, %v1210
        %v1212 = vlaneseq
        %v1213 = vshrl.u32 %v1212, 7
        %v1214 = vsub.s32 0, %v1213
        %v1215 = vrot.slane %v309, %v1214
        %v1216 = vadd.f32 %v1211, %v1215
        %1217 = vst.msk [vmem:[#allocation2] sm:$0xff] %vm331, %v1216
        %p1218 = scmp.eq.s32.totalorder %s20, 1
        // Predicated region
        $region49: #{tpu_custom_call.1} parent=39 // pred_check
          %p1219 = pneg %p1218
        $region50: #{tpu_custom_call.1} parent=39 // pred_check_branch
          %1221 = sbr.rel (%p1219) target = $region52
        $region51: #{tpu_custom_call.1} parent=39 // pred_region
          %1222 = vst.msk [vmem:[#allocation6] sm:$0xff] %vm331, %v1216
        $region52: #{tpu_custom_call.1} parent=39 // pred_fallthru
          _
        // Predicated region
        $region53: #{tpu_custom_call.1} parent=39 // pred_check
          %p1223 = pneg %p158
        $region54: #{tpu_custom_call.1} parent=39 // pred_check_branch
          %1225 = sbr.rel (%p1223) target = $region56
        $region55: #{tpu_custom_call.1} parent=39 // pred_region
          %s1227 = ssub.s32 128, 128
          %1228 = vsyncadd [#allocation5], %s1227
          %s1230 = sshll.u32 [#allocation6], 4
          %s1231 = int_to_ptr.vmem [resolvable:$true] %s1230
          %1233 = dma.vmem_to_hbm [thread:$0]  %s1231, 128, %s5, [#allocation5]
        $region56: #{tpu_custom_call.1} parent=39 // pred_fallthru
          _
        // Predicated region
        $region57: #{tpu_custom_call.1} parent=39 // pred_check
          %p1234 = pneg %p158
        $region58: #{tpu_custom_call.1} parent=39 // pred_check_branch
          %1236 = sbr.rel (%p1234) target = $region60
        $region59: #{tpu_custom_call.1} parent=39 // pred_region
          %1237 = dma.done [#allocation5], 128
        $region60: #{tpu_custom_call.1} parent=39 // pred_fallthru
          _
      $region40: #{tpu_custom_call.1} parent=5 // pred_fallthru
        _
      %p1238 = scmp.le.s32.totalorder 2, %s15
      // Predicated region
      $region61: #{tpu_custom_call.1} parent=5 // pred_check
        %p1239 = pneg %p1238
      $region62: #{tpu_custom_call.1} parent=5 // pred_check_branch
        %1241 = sbr.rel (%p1239) target = $region64
      $region63: #{tpu_custom_call.1} parent=5 // pred_region
        %s1242 = ssub.s32 %s15, 2
      $region64: #{tpu_custom_call.1} parent=5 // pred_fallthru
        _
    $region6: #{tpu_custom_call.1} parent=1 // loop_footer
      %s19 = sadd.s32 1, %s15
    $region7: #{tpu_custom_call.1} parent=1 // loop_footer_branch
      %14 = sbr.rel target = $region3
    $region8: #{tpu_custom_call.1} parent=1 // loop_exit
      _
    %1243 = vsyncpa [#allocation4], 1
    %s1244 = scalar_lea.sflag [#allocation4], 1
    %1245 = vsyncpa %s1244, 1
    %1246 = vsyncpa [#allocation5], 1
    %s1247 = scalar_lea.sflag [#allocation5], 1
    %1248 = vsyncpa %s1247, 1

</llo_original>
